<compile_context>
chip_gen: v7x
topology: tpu7x:2x2x1
jax: 0.10.0
libtpu: 0.0.40
codegen_flags: <defaults>
</compile_context>

<pallas_src>
import jax
import jax.numpy as jnp
from jax.experimental import pallas as pl
from jax.experimental.pallas import tpu as pltpu


def _round_up(a, b):
    return (a + b - 1) // b * b


def _gru_recurrent_kernel(gi_ref, whh_t_ref, bhn_ref, out_ref, h_scratch):
    """One grid step == TIME_CHUNK timesteps of the GRU recurrence.

    gi_ref:    (TC, Bp, 3*Hp) f32  precomputed x@W_ih^T + b_ih (+ b_hh for r,z),
                                   gate-padded layout [r | z | n]
    whh_t_ref: (Hp, 3*Hp)     f32  hidden->hidden weights, transposed, gate-padded
    bhn_ref:   (1, Hp)        f32  b_hh for the n gate
    out_ref:   (TC, Bp, Hp)   f32  hidden states for this chunk (time-major)
    h_scratch: (Bp, Hp)       f32  carried hidden state (persists across grid)
    """
    c = pl.program_id(0)

    @pl.when(c == 0)
    def _():
        h_scratch[...] = jnp.zeros_like(h_scratch)

    hp = h_scratch.shape[-1]
    whh_t = whh_t_ref[...]  # loaded once per chunk
    # Hoist the bias broadcast out of the unrolled time loop (no CSE across iters).
    bhn = jnp.broadcast_to(bhn_ref[...], h_scratch.shape)

    def step(s, h):
        gi = gi_ref[s]                                         # (Bp, 3Hp) f32
        gh = jnp.dot(h, whh_t,                                 # MXU, f32 acc
                     preferred_element_type=jnp.float32)       # (Bp, 3Hp)
        # Lane-aligned gate slices (each gate occupies a full Hp-wide slot).
        r = jax.nn.sigmoid(gi[:, :hp] + gh[:, :hp])
        z = jax.nn.sigmoid(gi[:, hp:2 * hp] + gh[:, hp:2 * hp])
        n = jnp.tanh(gi[:, 2 * hp:] + r * (gh[:, 2 * hp:] + bhn))
        h_new = (1.0 - z) * n + z * h
        out_ref[s] = h_new.astype(out_ref.dtype)
        return h_new

    h_final = jax.lax.fori_loop(0, gi_ref.shape[0], step, h_scratch[...],
                                unroll=True)
    h_scratch[...] = h_final


def gru_forward(x, w_ih, w_hh, b_ih, b_hh, *, time_chunk=8):
    """x: [B, T, I] f32.  Weights follow torch.nn.GRU layout:
    w_ih [3H, I], w_hh [3H, H], b_ih/b_hh [3H] with gate order (r, z, n).
    Returns out: [B, T, H] f32.
    """
    f32 = jnp.float32
    B, T, I = x.shape
    H = w_hh.shape[1]

    Hp = _round_up(H, 128)      # lane-align each gate slot
    Bp = _round_up(B, 8)        # sublane-align batch
    TC = min(time_chunk, T)     # timesteps per grid step
    Tp = _round_up(T, TC)

    # --- Gate-padded weight / bias layouts: [ r | z | n ], each Hp wide. ---
    w_ih_t = jnp.transpose(w_ih).astype(f32)          # [I, 3H]
    w_hh_t = jnp.transpose(w_hh).astype(f32)          # [H, 3H]

    w_ih_t_pad = jnp.zeros((I, 3 * Hp), f32)
    w_hh_t_pad = jnp.zeros((Hp, 3 * Hp), f32)
    b_fold_pad = jnp.zeros((3 * Hp,), f32)
    b_hn_pad = jnp.zeros((1, Hp), f32)

    # b_ih for all gates + b_hh for r,z folded into the lifted projection;
    # b_hh(n) must stay inside r * (W_hn h + b_hn), so it goes to the kernel.
    b_fold = b_ih.astype(f32) + jnp.concatenate(
        [b_hh[:2 * H].astype(f32), jnp.zeros((H,), f32)])

    for g in range(3):
        w_ih_t_pad = w_ih_t_pad.at[:, g * Hp:g * Hp + H].set(w_ih_t[:, g * H:(g + 1) * H])
        w_hh_t_pad = w_hh_t_pad.at[:H, g * Hp:g * Hp + H].set(w_hh_t[:, g * H:(g + 1) * H])
        b_fold_pad = b_fold_pad.at[g * Hp:g * Hp + H].set(b_fold[g * H:(g + 1) * H])
    b_hn_pad = b_hn_pad.at[0, :H].set(b_hh[2 * H:].astype(f32))

    # --- Lifted input projection: one big f32 MXU matmul over all timesteps,
    # emitted time-major directly (XLA fuses the transpose into the dot). ---
    gi_all = jnp.einsum(
        'bti,ig->tbg',
        x.astype(f32),
        w_ih_t_pad,
        preferred_element_type=f32,
    ) + b_fold_pad                                               # [T, B, 3Hp] f32
    gi_all = jnp.pad(gi_all, ((0, Tp - T), (0, Bp - B), (0, 0)))  # [Tp, Bp, 3Hp]

    out_tm = pl.pallas_call(
        _gru_recurrent_kernel,
        out_shape=jax.ShapeDtypeStruct((Tp, Bp, Hp), f32),
        grid_spec=pltpu.PrefetchScalarGridSpec(
            num_scalar_prefetch=0,
            grid=(Tp // TC,),
            in_specs=[
                pl.BlockSpec((TC, Bp, 3 * Hp), lambda c: (c, 0, 0)),
                # Constant-index (resident) weights/bias; for very large H on
                # v7x consider pipeline_mode=pl.Buffered(1) / tiling the 3Hp axis.
                pl.BlockSpec((Hp, 3 * Hp), lambda c: (0, 0)),
                pl.BlockSpec((1, Hp), lambda c: (0, 0)),
            ],
            out_specs=pl.BlockSpec((TC, Bp, Hp), lambda c: (c, 0, 0)),
            scratch_shapes=[pltpu.VMEM((Bp, Hp), f32)],
        ),
        compiler_params=pltpu.CompilerParams(
            dimension_semantics=("arbitrary",),      # serial recurrence over time
            vmem_limit_bytes=32 * 1024 * 1024,
        ),
    )(gi_all, w_hh_t_pad, b_hn_pad)

    # Strip padding and return batch-first to match torch.nn.GRU(batch_first=True).
    return jnp.transpose(out_tm[:T, :B, :H], (1, 0, 2))


def _gru_reference(x, w_ih, w_hh, b_ih, b_hh):
    """Pure-JAX f32 reference (matches torch.nn.GRU, 1 layer, batch_first)."""
    B, T, I = x.shape
    H = w_hh.shape[1]

    def step(h, x_t):
        gi = jnp.dot(x_t, w_ih.T, preferred_element_type=jnp.float32) + b_ih
        gh = jnp.dot(h, w_hh.T, preferred_element_type=jnp.float32) + b_hh
        r = jax.nn.sigmoid(gi[:, :H] + gh[:, :H])
        z = jax.nn.sigmoid(gi[:, H:2 * H] + gh[:, H:2 * H])
        n = jnp.tanh(gi[:, 2 * H:] + r * gh[:, 2 * H:])
        h_new = (1.0 - z) * n + z * h
        return h_new, h_new

    h0 = jnp.zeros((B, H), jnp.float32)
    _, outs = jax.lax.scan(step, h0, jnp.transpose(x, (1, 0, 2)))
    return jnp.transpose(outs, (1, 0, 2))


if __name__ == "__main__":
    # Small, deterministic problem: batch=2, seq=8, input=4, hidden=32
    B, T, I, H = 2, 8, 4, 32

    key = jax.random.PRNGKey(0)
    kx, k1, k2, k3, k4 = jax.random.split(key, 5)

    # PyTorch nn.GRU init: uniform(-1/sqrt(H), 1/sqrt(H))
    bound = 1.0 / jnp.sqrt(jnp.float32(H))
    x = jax.random.normal(kx, (B, T, I), dtype=jnp.float32)
    w_ih = jax.random.uniform(k1, (3 * H, I), jnp.float32, -bound, bound)
    w_hh = jax.random.uniform(k2, (3 * H, H), jnp.float32, -bound, bound)
    b_ih = jax.random.uniform(k3, (3 * H,), jnp.float32, -bound, bound)
    b_hh = jax.random.uniform(k4, (3 * H,), jnp.float32, -bound, bound)

    out = jax.jit(gru_forward)(x, w_ih, w_hh, b_ih, b_hh)
    jax.block_until_ready(out)
    assert out.shape == (B, T, H)

    # All-f32 kernel vs exact-f32 torch.nn.GRU semantics: tight tolerance.
    ref_f32 = _gru_reference(x, w_ih, w_hh, b_ih, b_hh)
    assert jnp.allclose(out, ref_f32, atol=1e-4, rtol=0), \
        "mismatch vs f32 JAX reference"

    print("KERNEL_OK")
</pallas_src>

<mosaic_0001>
module attributes {stable_mosaic.version = 11 : i64} {
  func.func @_gru_recurrent_kernel(%arg0: i32, %arg1: memref<8x8x384xf32, #tpu.memory_space<vmem>>, %arg2: memref<128x384xf32, #tpu.memory_space<vmem>>, %arg3: memref<1x128xf32, #tpu.memory_space<vmem>>, %arg4: memref<8x8x128xf32, #tpu.memory_space<vmem>>, %arg5: memref<8x128xf32, #tpu.memory_space<vmem>>) attributes {dimension_semantics = [#tpu.dimension_semantics<arbitrary>], iteration_bounds = array<i64: 1>, scalar_prefetch = 0 : i64, scratch_operands = 1 : i64, tpu.core_type = #tpu.core_type<tc>, window_params = [{transform_indices = @transform_0, window_bounds = array<i64: 8, 8, 384>}, {pipeline_mode = #tpu.pipeline_mode<synchronous>, transform_indices = @transform_1, window_bounds = array<i64: 128, 384>}, {pipeline_mode = #tpu.pipeline_mode<synchronous>, transform_indices = @transform_2, window_bounds = array<i64: 1, 128>}, {transform_indices = @transform_3, window_bounds = array<i64: 8, 8, 128>}]} {
    %c0_i32 = arith.constant 0 : i32
    %0 = arith.cmpi eq, %arg0, %c0_i32 : i32
    %1 = arith.extui %0 : i1 to i32
    %c0_i32_0 = arith.constant 0 : i32
    %2 = arith.cmpi ne, %1, %c0_i32_0 : i32
    scf.if %2 {
      %cst_72 = arith.constant 0.000000e+00 : f32
      %289 = vector.broadcast %cst_72 : f32 to vector<8x128xf32>
      %c0_73 = arith.constant 0 : index
      %c0_74 = arith.constant 0 : index
      %290 = vector.load %arg5[%c0_73, %c0_74] : memref<8x128xf32, #tpu.memory_space<vmem>>, vector<8x128xf32>
      tpu.vector_store %arg5[%c0_73, %c0_74], %289 {strides = array<i32>} : memref<8x128xf32, #tpu.memory_space<vmem>>, vector<8x128xf32>,
    } else {
    }
    %c0 = arith.constant 0 : index
    %c0_1 = arith.constant 0 : index
    %3 = vector.load %arg2[%c0, %c0_1] : memref<128x384xf32, #tpu.memory_space<vmem>>, vector<128x384xf32>
    %c0_2 = arith.constant 0 : index
    %c0_3 = arith.constant 0 : index
    %4 = vector.load %arg3[%c0_2, %c0_3] : memref<1x128xf32, #tpu.memory_space<vmem>>, vector<1x128xf32>
    %5 = vector.shape_cast %4 : vector<1x128xf32> to vector<1x128xf32>
    %6 = vector.broadcast %5 : vector<1x128xf32> to vector<8x128xf32>
    %c0_4 = arith.constant 0 : index
    %c0_5 = arith.constant 0 : index
    %7 = vector.load %arg5[%c0_4, %c0_5] : memref<8x128xf32, #tpu.memory_space<vmem>>, vector<8x128xf32>
    %c0_i32_6 = arith.constant 0 : i32
    %8 = arith.index_cast %c0_i32_6 : i32 to index
    %c0_7 = arith.constant 0 : index
    %c0_8 = arith.constant 0 : index
    %9 = vector.load %arg1[%8, %c0_7, %c0_8] : memref<8x8x384xf32, #tpu.memory_space<vmem>>, vector<1x8x384xf32>
    %10 = vector.shape_cast %9 : vector<1x8x384xf32> to vector<8x384xf32>
    %cst = arith.constant dense<0.000000e+00> : vector<8x384xf32>
    %11 = tpu.matmul %7, %3, %cst {dimension_numbers = #tpu.dot_dimension_numbers<[1], [0], [0], [1], [0, 0, 1, 1], [], []>} : vector<8x128xf32>, vector<128x384xf32>, vector<8x384xf32> -> vector<8x384xf32>
    %12 = vector.extract_strided_slice %10 {offsets = [0, 0], sizes = [8, 128], strides = [1, 1]} : vector<8x384xf32> to vector<8x128xf32>
    %13 = vector.extract_strided_slice %11 {offsets = [0, 0], sizes = [8, 128], strides = [1, 1]} : vector<8x384xf32> to vector<8x128xf32>
    %14 = arith.addf %12, %13 : vector<8x128xf32>
    %15 = arith.negf %14 : vector<8x128xf32>
    %16 = math.exp %15 : vector<8x128xf32>
    %cst_9 = arith.constant 1.000000e+00 : f32
    %17 = vector.broadcast %cst_9 : f32 to vector<8x128xf32>
    %18 = arith.addf %17, %16 : vector<8x128xf32>
    %19 = arith.divf %17, %18 : vector<8x128xf32>
    %20 = vector.extract_strided_slice %10 {offsets = [0, 128], sizes = [8, 128], strides = [1, 1]} : vector<8x384xf32> to vector<8x128xf32>
    %21 = vector.extract_strided_slice %11 {offsets = [0, 128], sizes = [8, 128], strides = [1, 1]} : vector<8x384xf32> to vector<8x128xf32>
    %22 = arith.addf %20, %21 : vector<8x128xf32>
    %23 = arith.negf %22 : vector<8x128xf32>
    %24 = math.exp %23 : vector<8x128xf32>
    %cst_10 = arith.constant 1.000000e+00 : f32
    %25 = vector.broadcast %cst_10 : f32 to vector<8x128xf32>
    %26 = arith.addf %25, %24 : vector<8x128xf32>
    %27 = arith.divf %25, %26 : vector<8x128xf32>
    %28 = vector.extract_strided_slice %10 {offsets = [0, 256], sizes = [8, 128], strides = [1, 1]} : vector<8x384xf32> to vector<8x128xf32>
    %29 = vector.extract_strided_slice %11 {offsets = [0, 256], sizes = [8, 128], strides = [1, 1]} : vector<8x384xf32> to vector<8x128xf32>
    %30 = arith.addf %29, %6 : vector<8x128xf32>
    %31 = arith.mulf %19, %30 : vector<8x128xf32>
    %32 = arith.addf %28, %31 : vector<8x128xf32>
    %33 = math.tanh %32 : vector<8x128xf32>
    %cst_11 = arith.constant 1.000000e+00 : f32
    %34 = vector.broadcast %cst_11 : f32 to vector<8x128xf32>
    %35 = arith.subf %34, %27 : vector<8x128xf32>
    %36 = arith.mulf %35, %33 : vector<8x128xf32>
    %37 = arith.mulf %27, %7 : vector<8x128xf32>
    %38 = arith.addf %36, %37 : vector<8x128xf32>
    %39 = arith.index_cast %c0_i32_6 : i32 to index
    %c0_12 = arith.constant 0 : index
    %c0_13 = arith.constant 0 : index
    %40 = vector.load %arg4[%39, %c0_12, %c0_13] : memref<8x8x128xf32, #tpu.memory_space<vmem>>, vector<1x8x128xf32>
    %41 = vector.shape_cast %40 : vector<1x8x128xf32> to vector<8x128xf32>
    %42 = vector.shape_cast %38 : vector<8x128xf32> to vector<1x8x128xf32>
    tpu.vector_store %arg4[%39, %c0_12, %c0_13], %42 {strides = array<i32>} : memref<8x8x128xf32, #tpu.memory_space<vmem>>, vector<1x8x128xf32>,
    %c1_i32 = arith.constant 1 : i32
    %43 = arith.index_cast %c1_i32 : i32 to index
    %c0_14 = arith.constant 0 : index
    %c0_15 = arith.constant 0 : index
    %44 = vector.load %arg1[%43, %c0_14, %c0_15] : memref<8x8x384xf32, #tpu.memory_space<vmem>>, vector<1x8x384xf32>
    %45 = vector.shape_cast %44 : vector<1x8x384xf32> to vector<8x384xf32>
    %cst_16 = arith.constant dense<0.000000e+00> : vector<8x384xf32>
    %46 = tpu.matmul %38, %3, %cst_16 {dimension_numbers = #tpu.dot_dimension_numbers<[1], [0], [0], [1], [0, 0, 1, 1], [], []>} : vector<8x128xf32>, vector<128x384xf32>, vector<8x384xf32> -> vector<8x384xf32>
    %47 = vector.extract_strided_slice %45 {offsets = [0, 0], sizes = [8, 128], strides = [1, 1]} : vector<8x384xf32> to vector<8x128xf32>
    %48 = vector.extract_strided_slice %46 {offsets = [0, 0], sizes = [8, 128], strides = [1, 1]} : vector<8x384xf32> to vector<8x128xf32>
    %49 = arith.addf %47, %48 : vector<8x128xf32>
    %50 = arith.negf %49 : vector<8x128xf32>
    %51 = math.exp %50 : vector<8x128xf32>
    %cst_17 = arith.constant 1.000000e+00 : f32
    %52 = vector.broadcast %cst_17 : f32 to vector<8x128xf32>
    %53 = arith.addf %52, %51 : vector<8x128xf32>
    %54 = arith.divf %52, %53 : vector<8x128xf32>
    %55 = vector.extract_strided_slice %45 {offsets = [0, 128], sizes = [8, 128], strides = [1, 1]} : vector<8x384xf32> to vector<8x128xf32>
    %56 = vector.extract_strided_slice %46 {offsets = [0, 128], sizes = [8, 128], strides = [1, 1]} : vector<8x384xf32> to vector<8x128xf32>
    %57 = arith.addf %55, %56 : vector<8x128xf32>
    %58 = arith.negf %57 : vector<8x128xf32>
    %59 = math.exp %58 : vector<8x128xf32>
    %cst_18 = arith.constant 1.000000e+00 : f32
    %60 = vector.broadcast %cst_18 : f32 to vector<8x128xf32>
    %61 = arith.addf %60, %59 : vector<8x128xf32>
    %62 = arith.divf %60, %61 : vector<8x128xf32>
    %63 = vector.extract_strided_slice %45 {offsets = [0, 256], sizes = [8, 128], strides = [1, 1]} : vector<8x384xf32> to vector<8x128xf32>
    %64 = vector.extract_strided_slice %46 {offsets = [0, 256], sizes = [8, 128], strides = [1, 1]} : vector<8x384xf32> to vector<8x128xf32>
    %65 = arith.addf %64, %6 : vector<8x128xf32>
    %66 = arith.mulf %54, %65 : vector<8x128xf32>
    %67 = arith.addf %63, %66 : vector<8x128xf32>
    %68 = math.tanh %67 : vector<8x128xf32>
    %cst_19 = arith.constant 1.000000e+00 : f32
    %69 = vector.broadcast %cst_19 : f32 to vector<8x128xf32>
    %70 = arith.subf %69, %62 : vector<8x128xf32>
    %71 = arith.mulf %70, %68 : vector<8x128xf32>
    %72 = arith.mulf %62, %38 : vector<8x128xf32>
    %73 = arith.addf %71, %72 : vector<8x128xf32>
    %74 = arith.index_cast %c1_i32 : i32 to index
    %c0_20 = arith.constant 0 : index
    %c0_21 = arith.constant 0 : index
    %75 = vector.load %arg4[%74, %c0_20, %c0_21] : memref<8x8x128xf32, #tpu.memory_space<vmem>>, vector<1x8x128xf32>
    %76 = vector.shape_cast %75 : vector<1x8x128xf32> to vector<8x128xf32>
    %77 = vector.shape_cast %73 : vector<8x128xf32> to vector<1x8x128xf32>
    tpu.vector_store %arg4[%74, %c0_20, %c0_21], %77 {strides = array<i32>} : memref<8x8x128xf32, #tpu.memory_space<vmem>>, vector<1x8x128xf32>,
    %c2_i32 = arith.constant 2 : i32
    %78 = arith.index_cast %c2_i32 : i32 to index
    %c0_22 = arith.constant 0 : index
    %c0_23 = arith.constant 0 : index
    %79 = vector.load %arg1[%78, %c0_22, %c0_23] : memref<8x8x384xf32, #tpu.memory_space<vmem>>, vector<1x8x384xf32>
    %80 = vector.shape_cast %79 : vector<1x8x384xf32> to vector<8x384xf32>
    %cst_24 = arith.constant dense<0.000000e+00> : vector<8x384xf32>
    %81 = tpu.matmul %73, %3, %cst_24 {dimension_numbers = #tpu.dot_dimension_numbers<[1], [0], [0], [1], [0, 0, 1, 1], [], []>} : vector<8x128xf32>, vector<128x384xf32>, vector<8x384xf32> -> vector<8x384xf32>
    %82 = vector.extract_strided_slice %80 {offsets = [0, 0], sizes = [8, 128], strides = [1, 1]} : vector<8x384xf32> to vector<8x128xf32>
    %83 = vector.extract_strided_slice %81 {offsets = [0, 0], sizes = [8, 128], strides = [1, 1]} : vector<8x384xf32> to vector<8x128xf32>
    %84 = arith.addf %82, %83 : vector<8x128xf32>
    %85 = arith.negf %84 : vector<8x128xf32>
    %86 = math.exp %85 : vector<8x128xf32>
    %cst_25 = arith.constant 1.000000e+00 : f32
    %87 = vector.broadcast %cst_25 : f32 to vector<8x128xf32>
    %88 = arith.addf %87, %86 : vector<8x128xf32>
    %89 = arith.divf %87, %88 : vector<8x128xf32>
    %90 = vector.extract_strided_slice %80 {offsets = [0, 128], sizes = [8, 128], strides = [1, 1]} : vector<8x384xf32> to vector<8x128xf32>
    %91 = vector.extract_strided_slice %81 {offsets = [0, 128], sizes = [8, 128], strides = [1, 1]} : vector<8x384xf32> to vector<8x128xf32>
    %92 = arith.addf %90, %91 : vector<8x128xf32>
    %93 = arith.negf %92 : vector<8x128xf32>
    %94 = math.exp %93 : vector<8x128xf32>
    %cst_26 = arith.constant 1.000000e+00 : f32
    %95 = vector.broadcast %cst_26 : f32 to vector<8x128xf32>
    %96 = arith.addf %95, %94 : vector<8x128xf32>
    %97 = arith.divf %95, %96 : vector<8x128xf32>
    %98 = vector.extract_strided_slice %80 {offsets = [0, 256], sizes = [8, 128], strides = [1, 1]} : vector<8x384xf32> to vector<8x128xf32>
    %99 = vector.extract_strided_slice %81 {offsets = [0, 256], sizes = [8, 128], strides = [1, 1]} : vector<8x384xf32> to vector<8x128xf32>
    %100 = arith.addf %99, %6 : vector<8x128xf32>
    %101 = arith.mulf %89, %100 : vector<8x128xf32>
    %102 = arith.addf %98, %101 : vector<8x128xf32>
    %103 = math.tanh %102 : vector<8x128xf32>
    %cst_27 = arith.constant 1.000000e+00 : f32
    %104 = vector.broadcast %cst_27 : f32 to vector<8x128xf32>
    %105 = arith.subf %104, %97 : vector<8x128xf32>
    %106 = arith.mulf %105, %103 : vector<8x128xf32>
    %107 = arith.mulf %97, %73 : vector<8x128xf32>
    %108 = arith.addf %106, %107 : vector<8x128xf32>
    %109 = arith.index_cast %c2_i32 : i32 to index
    %c0_28 = arith.constant 0 : index
    %c0_29 = arith.constant 0 : index
    %110 = vector.load %arg4[%109, %c0_28, %c0_29] : memref<8x8x128xf32, #tpu.memory_space<vmem>>, vector<1x8x128xf32>
    %111 = vector.shape_cast %110 : vector<1x8x128xf32> to vector<8x128xf32>
    %112 = vector.shape_cast %108 : vector<8x128xf32> to vector<1x8x128xf32>
    tpu.vector_store %arg4[%109, %c0_28, %c0_29], %112 {strides = array<i32>} : memref<8x8x128xf32, #tpu.memory_space<vmem>>, vector<1x8x128xf32>,
    %c3_i32 = arith.constant 3 : i32
    %113 = arith.index_cast %c3_i32 : i32 to index
    %c0_30 = arith.constant 0 : index
    %c0_31 = arith.constant 0 : index
    %114 = vector.load %arg1[%113, %c0_30, %c0_31] : memref<8x8x384xf32, #tpu.memory_space<vmem>>, vector<1x8x384xf32>
    %115 = vector.shape_cast %114 : vector<1x8x384xf32> to vector<8x384xf32>
    %cst_32 = arith.constant dense<0.000000e+00> : vector<8x384xf32>
    %116 = tpu.matmul %108, %3, %cst_32 {dimension_numbers = #tpu.dot_dimension_numbers<[1], [0], [0], [1], [0, 0, 1, 1], [], []>} : vector<8x128xf32>, vector<128x384xf32>, vector<8x384xf32> -> vector<8x384xf32>
    %117 = vector.extract_strided_slice %115 {offsets = [0, 0], sizes = [8, 128], strides = [1, 1]} : vector<8x384xf32> to vector<8x128xf32>
    %118 = vector.extract_strided_slice %116 {offsets = [0, 0], sizes = [8, 128], strides = [1, 1]} : vector<8x384xf32> to vector<8x128xf32>
    %119 = arith.addf %117, %118 : vector<8x128xf32>
    %120 = arith.negf %119 : vector<8x128xf32>
    %121 = math.exp %120 : vector<8x128xf32>
    %cst_33 = arith.constant 1.000000e+00 : f32
    %122 = vector.broadcast %cst_33 : f32 to vector<8x128xf32>
    %123 = arith.addf %122, %121 : vector<8x128xf32>
    %124 = arith.divf %122, %123 : vector<8x128xf32>
    %125 = vector.extract_strided_slice %115 {offsets = [0, 128], sizes = [8, 128], strides = [1, 1]} : vector<8x384xf32> to vector<8x128xf32>
    %126 = vector.extract_strided_slice %116 {offsets = [0, 128], sizes = [8, 128], strides = [1, 1]} : vector<8x384xf32> to vector<8x128xf32>
    %127 = arith.addf %125, %126 : vector<8x128xf32>
    %128 = arith.negf %127 : vector<8x128xf32>
    %129 = math.exp %128 : vector<8x128xf32>
    %cst_34 = arith.constant 1.000000e+00 : f32
    %130 = vector.broadcast %cst_34 : f32 to vector<8x128xf32>
    %131 = arith.addf %130, %129 : vector<8x128xf32>
    %132 = arith.divf %130, %131 : vector<8x128xf32>
    %133 = vector.extract_strided_slice %115 {offsets = [0, 256], sizes = [8, 128], strides = [1, 1]} : vector<8x384xf32> to vector<8x128xf32>
    %134 = vector.extract_strided_slice %116 {offsets = [0, 256], sizes = [8, 128], strides = [1, 1]} : vector<8x384xf32> to vector<8x128xf32>
    %135 = arith.addf %134, %6 : vector<8x128xf32>
    %136 = arith.mulf %124, %135 : vector<8x128xf32>
    %137 = arith.addf %133, %136 : vector<8x128xf32>
    %138 = math.tanh %137 : vector<8x128xf32>
    %cst_35 = arith.constant 1.000000e+00 : f32
    %139 = vector.broadcast %cst_35 : f32 to vector<8x128xf32>
    %140 = arith.subf %139, %132 : vector<8x128xf32>
    %141 = arith.mulf %140, %138 : vector<8x128xf32>
    %142 = arith.mulf %132, %108 : vector<8x128xf32>
    %143 = arith.addf %141, %142 : vector<8x128xf32>
    %144 = arith.index_cast %c3_i32 : i32 to index
    %c0_36 = arith.constant 0 : index
    %c0_37 = arith.constant 0 : index
    %145 = vector.load %arg4[%144, %c0_36, %c0_37] : memref<8x8x128xf32, #tpu.memory_space<vmem>>, vector<1x8x128xf32>
    %146 = vector.shape_cast %145 : vector<1x8x128xf32> to vector<8x128xf32>
    %147 = vector.shape_cast %143 : vector<8x128xf32> to vector<1x8x128xf32>
    tpu.vector_store %arg4[%144, %c0_36, %c0_37], %147 {strides = array<i32>} : memref<8x8x128xf32, #tpu.memory_space<vmem>>, vector<1x8x128xf32>,
    %c4_i32 = arith.constant 4 : i32
    %148 = arith.index_cast %c4_i32 : i32 to index
    %c0_38 = arith.constant 0 : index
    %c0_39 = arith.constant 0 : index
    %149 = vector.load %arg1[%148, %c0_38, %c0_39] : memref<8x8x384xf32, #tpu.memory_space<vmem>>, vector<1x8x384xf32>
    %150 = vector.shape_cast %149 : vector<1x8x384xf32> to vector<8x384xf32>
    %cst_40 = arith.constant dense<0.000000e+00> : vector<8x384xf32>
    %151 = tpu.matmul %143, %3, %cst_40 {dimension_numbers = #tpu.dot_dimension_numbers<[1], [0], [0], [1], [0, 0, 1, 1], [], []>} : vector<8x128xf32>, vector<128x384xf32>, vector<8x384xf32> -> vector<8x384xf32>
    %152 = vector.extract_strided_slice %150 {offsets = [0, 0], sizes = [8, 128], strides = [1, 1]} : vector<8x384xf32> to vector<8x128xf32>
    %153 = vector.extract_strided_slice %151 {offsets = [0, 0], sizes = [8, 128], strides = [1, 1]} : vector<8x384xf32> to vector<8x128xf32>
    %154 = arith.addf %152, %153 : vector<8x128xf32>
    %155 = arith.negf %154 : vector<8x128xf32>
    %156 = math.exp %155 : vector<8x128xf32>
    %cst_41 = arith.constant 1.000000e+00 : f32
    %157 = vector.broadcast %cst_41 : f32 to vector<8x128xf32>
    %158 = arith.addf %157, %156 : vector<8x128xf32>
    %159 = arith.divf %157, %158 : vector<8x128xf32>
    %160 = vector.extract_strided_slice %150 {offsets = [0, 128], sizes = [8, 128], strides = [1, 1]} : vector<8x384xf32> to vector<8x128xf32>
    %161 = vector.extract_strided_slice %151 {offsets = [0, 128], sizes = [8, 128], strides = [1, 1]} : vector<8x384xf32> to vector<8x128xf32>
    %162 = arith.addf %160, %161 : vector<8x128xf32>
    %163 = arith.negf %162 : vector<8x128xf32>
    %164 = math.exp %163 : vector<8x128xf32>
    %cst_42 = arith.constant 1.000000e+00 : f32
    %165 = vector.broadcast %cst_42 : f32 to vector<8x128xf32>
    %166 = arith.addf %165, %164 : vector<8x128xf32>
    %167 = arith.divf %165, %166 : vector<8x128xf32>
    %168 = vector.extract_strided_slice %150 {offsets = [0, 256], sizes = [8, 128], strides = [1, 1]} : vector<8x384xf32> to vector<8x128xf32>
    %169 = vector.extract_strided_slice %151 {offsets = [0, 256], sizes = [8, 128], strides = [1, 1]} : vector<8x384xf32> to vector<8x128xf32>
    %170 = arith.addf %169, %6 : vector<8x128xf32>
    %171 = arith.mulf %159, %170 : vector<8x128xf32>
    %172 = arith.addf %168, %171 : vector<8x128xf32>
    %173 = math.tanh %172 : vector<8x128xf32>
    %cst_43 = arith.constant 1.000000e+00 : f32
    %174 = vector.broadcast %cst_43 : f32 to vector<8x128xf32>
    %175 = arith.subf %174, %167 : vector<8x128xf32>
    %176 = arith.mulf %175, %173 : vector<8x128xf32>
    %177 = arith.mulf %167, %143 : vector<8x128xf32>
    %178 = arith.addf %176, %177 : vector<8x128xf32>
    %179 = arith.index_cast %c4_i32 : i32 to index
    %c0_44 = arith.constant 0 : index
    %c0_45 = arith.constant 0 : index
    %180 = vector.load %arg4[%179, %c0_44, %c0_45] : memref<8x8x128xf32, #tpu.memory_space<vmem>>, vector<1x8x128xf32>
    %181 = vector.shape_cast %180 : vector<1x8x128xf32> to vector<8x128xf32>
    %182 = vector.shape_cast %178 : vector<8x128xf32> to vector<1x8x128xf32>
    tpu.vector_store %arg4[%179, %c0_44, %c0_45], %182 {strides = array<i32>} : memref<8x8x128xf32, #tpu.memory_space<vmem>>, vector<1x8x128xf32>,
    %c5_i32 = arith.constant 5 : i32
    %183 = arith.index_cast %c5_i32 : i32 to index
    %c0_46 = arith.constant 0 : index
    %c0_47 = arith.constant 0 : index
    %184 = vector.load %arg1[%183, %c0_46, %c0_47] : memref<8x8x384xf32, #tpu.memory_space<vmem>>, vector<1x8x384xf32>
    %185 = vector.shape_cast %184 : vector<1x8x384xf32> to vector<8x384xf32>
    %cst_48 = arith.constant dense<0.000000e+00> : vector<8x384xf32>
    %186 = tpu.matmul %178, %3, %cst_48 {dimension_numbers = #tpu.dot_dimension_numbers<[1], [0], [0], [1], [0, 0, 1, 1], [], []>} : vector<8x128xf32>, vector<128x384xf32>, vector<8x384xf32> -> vector<8x384xf32>
    %187 = vector.extract_strided_slice %185 {offsets = [0, 0], sizes = [8, 128], strides = [1, 1]} : vector<8x384xf32> to vector<8x128xf32>
    %188 = vector.extract_strided_slice %186 {offsets = [0, 0], sizes = [8, 128], strides = [1, 1]} : vector<8x384xf32> to vector<8x128xf32>
    %189 = arith.addf %187, %188 : vector<8x128xf32>
    %190 = arith.negf %189 : vector<8x128xf32>
    %191 = math.exp %190 : vector<8x128xf32>
    %cst_49 = arith.constant 1.000000e+00 : f32
    %192 = vector.broadcast %cst_49 : f32 to vector<8x128xf32>
    %193 = arith.addf %192, %191 : vector<8x128xf32>
    %194 = arith.divf %192, %193 : vector<8x128xf32>
    %195 = vector.extract_strided_slice %185 {offsets = [0, 128], sizes = [8, 128], strides = [1, 1]} : vector<8x384xf32> to vector<8x128xf32>
    %196 = vector.extract_strided_slice %186 {offsets = [0, 128], sizes = [8, 128], strides = [1, 1]} : vector<8x384xf32> to vector<8x128xf32>
    %197 = arith.addf %195, %196 : vector<8x128xf32>
    %198 = arith.negf %197 : vector<8x128xf32>
    %199 = math.exp %198 : vector<8x128xf32>
    %cst_50 = arith.constant 1.000000e+00 : f32
    %200 = vector.broadcast %cst_50 : f32 to vector<8x128xf32>
    %201 = arith.addf %200, %199 : vector<8x128xf32>
    %202 = arith.divf %200, %201 : vector<8x128xf32>
    %203 = vector.extract_strided_slice %185 {offsets = [0, 256], sizes = [8, 128], strides = [1, 1]} : vector<8x384xf32> to vector<8x128xf32>
    %204 = vector.extract_strided_slice %186 {offsets = [0, 256], sizes = [8, 128], strides = [1, 1]} : vector<8x384xf32> to vector<8x128xf32>
    %205 = arith.addf %204, %6 : vector<8x128xf32>
    %206 = arith.mulf %194, %205 : vector<8x128xf32>
    %207 = arith.addf %203, %206 : vector<8x128xf32>
    %208 = math.tanh %207 : vector<8x128xf32>
    %cst_51 = arith.constant 1.000000e+00 : f32
    %209 = vector.broadcast %cst_51 : f32 to vector<8x128xf32>
    %210 = arith.subf %209, %202 : vector<8x128xf32>
    %211 = arith.mulf %210, %208 : vector<8x128xf32>
    %212 = arith.mulf %202, %178 : vector<8x128xf32>
    %213 = arith.addf %211, %212 : vector<8x128xf32>
    %214 = arith.index_cast %c5_i32 : i32 to index
    %c0_52 = arith.constant 0 : index
    %c0_53 = arith.constant 0 : index
    %215 = vector.load %arg4[%214, %c0_52, %c0_53] : memref<8x8x128xf32, #tpu.memory_space<vmem>>, vector<1x8x128xf32>
    %216 = vector.shape_cast %215 : vector<1x8x128xf32> to vector<8x128xf32>
    %217 = vector.shape_cast %213 : vector<8x128xf32> to vector<1x8x128xf32>
    tpu.vector_store %arg4[%214, %c0_52, %c0_53], %217 {strides = array<i32>} : memref<8x8x128xf32, #tpu.memory_space<vmem>>, vector<1x8x128xf32>,
    %c6_i32 = arith.constant 6 : i32
    %218 = arith.index_cast %c6_i32 : i32 to index
    %c0_54 = arith.constant 0 : index
    %c0_55 = arith.constant 0 : index
    %219 = vector.load %arg1[%218, %c0_54, %c0_55] : memref<8x8x384xf32, #tpu.memory_space<vmem>>, vector<1x8x384xf32>
    %220 = vector.shape_cast %219 : vector<1x8x384xf32> to vector<8x384xf32>
    %cst_56 = arith.constant dense<0.000000e+00> : vector<8x384xf32>
    %221 = tpu.matmul %213, %3, %cst_56 {dimension_numbers = #tpu.dot_dimension_numbers<[1], [0], [0], [1], [0, 0, 1, 1], [], []>} : vector<8x128xf32>, vector<128x384xf32>, vector<8x384xf32> -> vector<8x384xf32>
    %222 = vector.extract_strided_slice %220 {offsets = [0, 0], sizes = [8, 128], strides = [1, 1]} : vector<8x384xf32> to vector<8x128xf32>
    %223 = vector.extract_strided_slice %221 {offsets = [0, 0], sizes = [8, 128], strides = [1, 1]} : vector<8x384xf32> to vector<8x128xf32>
    %224 = arith.addf %222, %223 : vector<8x128xf32>
    %225 = arith.negf %224 : vector<8x128xf32>
    %226 = math.exp %225 : vector<8x128xf32>
    %cst_57 = arith.constant 1.000000e+00 : f32
    %227 = vector.broadcast %cst_57 : f32 to vector<8x128xf32>
    %228 = arith.addf %227, %226 : vector<8x128xf32>
    %229 = arith.divf %227, %228 : vector<8x128xf32>
    %230 = vector.extract_strided_slice %220 {offsets = [0, 128], sizes = [8, 128], strides = [1, 1]} : vector<8x384xf32> to vector<8x128xf32>
    %231 = vector.extract_strided_slice %221 {offsets = [0, 128], sizes = [8, 128], strides = [1, 1]} : vector<8x384xf32> to vector<8x128xf32>
    %232 = arith.addf %230, %231 : vector<8x128xf32>
    %233 = arith.negf %232 : vector<8x128xf32>
    %234 = math.exp %233 : vector<8x128xf32>
    %cst_58 = arith.constant 1.000000e+00 : f32
    %235 = vector.broadcast %cst_58 : f32 to vector<8x128xf32>
    %236 = arith.addf %235, %234 : vector<8x128xf32>
    %237 = arith.divf %235, %236 : vector<8x128xf32>
    %238 = vector.extract_strided_slice %220 {offsets = [0, 256], sizes = [8, 128], strides = [1, 1]} : vector<8x384xf32> to vector<8x128xf32>
    %239 = vector.extract_strided_slice %221 {offsets = [0, 256], sizes = [8, 128], strides = [1, 1]} : vector<8x384xf32> to vector<8x128xf32>
    %240 = arith.addf %239, %6 : vector<8x128xf32>
    %241 = arith.mulf %229, %240 : vector<8x128xf32>
    %242 = arith.addf %238, %241 : vector<8x128xf32>
    %243 = math.tanh %242 : vector<8x128xf32>
    %cst_59 = arith.constant 1.000000e+00 : f32
    %244 = vector.broadcast %cst_59 : f32 to vector<8x128xf32>
    %245 = arith.subf %244, %237 : vector<8x128xf32>
    %246 = arith.mulf %245, %243 : vector<8x128xf32>
    %247 = arith.mulf %237, %213 : vector<8x128xf32>
    %248 = arith.addf %246, %247 : vector<8x128xf32>
    %249 = arith.index_cast %c6_i32 : i32 to index
    %c0_60 = arith.constant 0 : index
    %c0_61 = arith.constant 0 : index
    %250 = vector.load %arg4[%249, %c0_60, %c0_61] : memref<8x8x128xf32, #tpu.memory_space<vmem>>, vector<1x8x128xf32>
    %251 = vector.shape_cast %250 : vector<1x8x128xf32> to vector<8x128xf32>
    %252 = vector.shape_cast %248 : vector<8x128xf32> to vector<1x8x128xf32>
    tpu.vector_store %arg4[%249, %c0_60, %c0_61], %252 {strides = array<i32>} : memref<8x8x128xf32, #tpu.memory_space<vmem>>, vector<1x8x128xf32>,
    %c7_i32 = arith.constant 7 : i32
    %253 = arith.index_cast %c7_i32 : i32 to index
    %c0_62 = arith.constant 0 : index
    %c0_63 = arith.constant 0 : index
    %254 = vector.load %arg1[%253, %c0_62, %c0_63] : memref<8x8x384xf32, #tpu.memory_space<vmem>>, vector<1x8x384xf32>
    %255 = vector.shape_cast %254 : vector<1x8x384xf32> to vector<8x384xf32>
    %cst_64 = arith.constant dense<0.000000e+00> : vector<8x384xf32>
    %256 = tpu.matmul %248, %3, %cst_64 {dimension_numbers = #tpu.dot_dimension_numbers<[1], [0], [0], [1], [0, 0, 1, 1], [], []>} : vector<8x128xf32>, vector<128x384xf32>, vector<8x384xf32> -> vector<8x384xf32>
    %257 = vector.extract_strided_slice %255 {offsets = [0, 0], sizes = [8, 128], strides = [1, 1]} : vector<8x384xf32> to vector<8x128xf32>
    %258 = vector.extract_strided_slice %256 {offsets = [0, 0], sizes = [8, 128], strides = [1, 1]} : vector<8x384xf32> to vector<8x128xf32>
    %259 = arith.addf %257, %258 : vector<8x128xf32>
    %260 = arith.negf %259 : vector<8x128xf32>
    %261 = math.exp %260 : vector<8x128xf32>
    %cst_65 = arith.constant 1.000000e+00 : f32
    %262 = vector.broadcast %cst_65 : f32 to vector<8x128xf32>
    %263 = arith.addf %262, %261 : vector<8x128xf32>
    %264 = arith.divf %262, %263 : vector<8x128xf32>
    %265 = vector.extract_strided_slice %255 {offsets = [0, 128], sizes = [8, 128], strides = [1, 1]} : vector<8x384xf32> to vector<8x128xf32>
    %266 = vector.extract_strided_slice %256 {offsets = [0, 128], sizes = [8, 128], strides = [1, 1]} : vector<8x384xf32> to vector<8x128xf32>
    %267 = arith.addf %265, %266 : vector<8x128xf32>
    %268 = arith.negf %267 : vector<8x128xf32>
    %269 = math.exp %268 : vector<8x128xf32>
    %cst_66 = arith.constant 1.000000e+00 : f32
    %270 = vector.broadcast %cst_66 : f32 to vector<8x128xf32>
    %271 = arith.addf %270, %269 : vector<8x128xf32>
    %272 = arith.divf %270, %271 : vector<8x128xf32>
    %273 = vector.extract_strided_slice %255 {offsets = [0, 256], sizes = [8, 128], strides = [1, 1]} : vector<8x384xf32> to vector<8x128xf32>
    %274 = vector.extract_strided_slice %256 {offsets = [0, 256], sizes = [8, 128], strides = [1, 1]} : vector<8x384xf32> to vector<8x128xf32>
    %275 = arith.addf %274, %6 : vector<8x128xf32>
    %276 = arith.mulf %264, %275 : vector<8x128xf32>
    %277 = arith.addf %273, %276 : vector<8x128xf32>
    %278 = math.tanh %277 : vector<8x128xf32>
    %cst_67 = arith.constant 1.000000e+00 : f32
    %279 = vector.broadcast %cst_67 : f32 to vector<8x128xf32>
    %280 = arith.subf %279, %272 : vector<8x128xf32>
    %281 = arith.mulf %280, %278 : vector<8x128xf32>
    %282 = arith.mulf %272, %248 : vector<8x128xf32>
    %283 = arith.addf %281, %282 : vector<8x128xf32>
    %284 = arith.index_cast %c7_i32 : i32 to index
    %c0_68 = arith.constant 0 : index
    %c0_69 = arith.constant 0 : index
    %285 = vector.load %arg4[%284, %c0_68, %c0_69] : memref<8x8x128xf32, #tpu.memory_space<vmem>>, vector<1x8x128xf32>
    %286 = vector.shape_cast %285 : vector<1x8x128xf32> to vector<8x128xf32>
    %287 = vector.shape_cast %283 : vector<8x128xf32> to vector<1x8x128xf32>
    tpu.vector_store %arg4[%284, %c0_68, %c0_69], %287 {strides = array<i32>} : memref<8x8x128xf32, #tpu.memory_space<vmem>>, vector<1x8x128xf32>,
    %c8_i32 = arith.constant 8 : i32
    %c0_70 = arith.constant 0 : index
    %c0_71 = arith.constant 0 : index
    %288 = vector.load %arg5[%c0_70, %c0_71] : memref<8x128xf32, #tpu.memory_space<vmem>>, vector<8x128xf32>
    tpu.vector_store %arg5[%c0_70, %c0_71], %283 {strides = array<i32>} : memref<8x128xf32, #tpu.memory_space<vmem>>, vector<8x128xf32>,
    return
  }
  func.func @transform_0(%arg0: i32) -> (i32, i32, i32) {
    %c0_i32 = arith.constant 0 : i32
    %c0_i32_0 = arith.constant 0 : i32
    %c0_i32_1 = arith.constant 0 : i32
    return %arg0, %c0_i32, %c0_i32_0 : i32, i32, i32
  }
  func.func @transform_1(%arg0: i32) -> (i32, i32) {
    %c0_i32 = arith.constant 0 : i32
    %c0_i32_0 = arith.constant 0 : i32
    %c0_i32_1 = arith.constant 0 : i32
    return %c0_i32, %c0_i32_0 : i32, i32
  }
  func.func @transform_2(%arg0: i32) -> (i32, i32) {
    %c0_i32 = arith.constant 0 : i32
    %c0_i32_0 = arith.constant 0 : i32
    %c0_i32_1 = arith.constant 0 : i32
    return %c0_i32, %c0_i32_0 : i32, i32
  }
  func.func @transform_3(%arg0: i32) -> (i32, i32, i32) {
    %c0_i32 = arith.constant 0 : i32
    %c0_i32_0 = arith.constant 0 : i32
    %c0_i32_1 = arith.constant 0 : i32
    return %arg0, %c0_i32, %c0_i32_0 : i32, i32, i32
  }
}

</mosaic_0001>

<llo_original>
// kernel: gru_forward.1
$region0: #{gru_forward.1}
  #allocation0 [shape = 'u32[]', space=smem, size = 0x4, offset = 0x4, fixed_abs, tag = 'smem constant byte address 0x4 - core index']
  #allocation1 [shape = 'u32[144,128]{1,0:T(1,128)}', space=vmem, size = 0x12000, scoped, tag = 'internal scratch']
  #allocation2 [shape = 'f32[8,128]{1,0:T(8,128)}', space=vmem, size = 0x1000, scoped, tag = 'scratch operand']
  %s0 = inlined_call_operand.vmem [shape: f32[8,8,384], index: 0, kind: input, shape index: {}]
  %s1 = inlined_call_operand.vmem [shape: f32[128,384], index: 1, kind: input, shape index: {}]
  %s2 = inlined_call_operand.vmem [shape: f32[1,128], index: 2, kind: input, shape index: {}]
  %s3 = inlined_call_operand.vmem [shape: f32[8,8,128], index: 3, kind: output, shape index: {}]
  %s4 = sld [smem:[#allocation0]]
  $region26: #{gru_forward.1} parent=0
    _
  %s6 = ssub.s32 1, %s4
  %s7 = scalar_select 0, %s6, %s4
  // Predicated region
  $region2: #{gru_forward.1} parent=0 // pred_check
    _
  $region3: #{gru_forward.1} parent=0 // pred_check_branch
    %9 = sbr.rel (0) target = $region5
  $region4: #{gru_forward.1} parent=0 // pred_region
    _
  $region5: #{gru_forward.1} parent=0 // pred_fallthru
    _
  // Predicated region
  $region6: #{gru_forward.1} parent=0 // pred_check
    _
  $region7: #{gru_forward.1} parent=0 // pred_check_branch
    %11 = sbr.rel (0) target = $region9
  $region8: #{gru_forward.1} parent=0 // pred_region
    _
  $region9: #{gru_forward.1} parent=0 // pred_fallthru
    _
  // Predicated region
  $region10: #{gru_forward.1} parent=0 // pred_check
    _
  $region11: #{gru_forward.1} parent=0 // pred_check_branch
    %13 = sbr.rel (0) target = $region13
  $region12: #{gru_forward.1} parent=0 // pred_region
    _
  $region13: #{gru_forward.1} parent=0 // pred_fallthru
    _
  %p14 = scmp.eq.s32.totalorder 0, 0
  // Predicated region
  $region14: #{gru_forward.1} parent=0 // pred_check
    %p15 = pneg %p14
  $region15: #{gru_forward.1} parent=0 // pred_check_branch
    %17 = sbr.rel (%p15) target = $region17
  $region16: #{gru_forward.1} parent=0 // pred_region
    %18 = vst [vmem:[#allocation2] sm:$0xff] 0.0
  $region17: #{gru_forward.1} parent=0 // pred_fallthru
    _
  %v19 = vld [vmem:[%s1] sm:$0xff]
  %v20 = vld [vmem:[%s1 + $0x8] sm:$0xff]
  %v21 = vld [vmem:[%s1 + $0x10] sm:$0xff]
  %v22 = vld [vmem:[%s1 + $0x18] sm:$0xff]
  %v23 = vld [vmem:[%s1 + $0x20] sm:$0xff]
  %v24 = vld [vmem:[%s1 + $0x28] sm:$0xff]
  %v25 = vld [vmem:[%s1 + $0x30] sm:$0xff]
  %v26 = vld [vmem:[%s1 + $0x38] sm:$0xff]
  %v27 = vld [vmem:[%s1 + $0x40] sm:$0xff]
  %v28 = vld [vmem:[%s1 + $0x48] sm:$0xff]
  %v29 = vld [vmem:[%s1 + $0x50] sm:$0xff]
  %v30 = vld [vmem:[%s1 + $0x58] sm:$0xff]
  %v31 = vld [vmem:[%s1 + $0x60] sm:$0xff]
  %v32 = vld [vmem:[%s1 + $0x68] sm:$0xff]
  %v33 = vld [vmem:[%s1 + $0x70] sm:$0xff]
  %v34 = vld [vmem:[%s1 + $0x78] sm:$0xff]
  %v35 = vld [vmem:[%s1 + $0x80] sm:$0xff]
  %v36 = vld [vmem:[%s1 + $0x88] sm:$0xff]
  %v37 = vld [vmem:[%s1 + $0x90] sm:$0xff]
  %v38 = vld [vmem:[%s1 + $0x98] sm:$0xff]
  %v39 = vld [vmem:[%s1 + $0xa0] sm:$0xff]
  %v40 = vld [vmem:[%s1 + $0xa8] sm:$0xff]
  %v41 = vld [vmem:[%s1 + $0xb0] sm:$0xff]
  %v42 = vld [vmem:[%s1 + $0xb8] sm:$0xff]
  %v43 = vld [vmem:[%s1 + $0xc0] sm:$0xff]
  %v44 = vld [vmem:[%s1 + $0xc8] sm:$0xff]
  %v45 = vld [vmem:[%s1 + $0xd0] sm:$0xff]
  %v46 = vld [vmem:[%s1 + $0xd8] sm:$0xff]
  %v47 = vld [vmem:[%s1 + $0xe0] sm:$0xff]
  %v48 = vld [vmem:[%s1 + $0xe8] sm:$0xff]
  %v49 = vld [vmem:[%s1 + $0xf0] sm:$0xff]
  %v50 = vld [vmem:[%s1 + $0xf8] sm:$0xff]
  %v51 = vld [vmem:[%s1 + $0x100] sm:$0xff]
  %v52 = vld [vmem:[%s1 + $0x108] sm:$0xff]
  %v53 = vld [vmem:[%s1 + $0x110] sm:$0xff]
  %v54 = vld [vmem:[%s1 + $0x118] sm:$0xff]
  %v55 = vld [vmem:[%s1 + $0x120] sm:$0xff]
  %v56 = vld [vmem:[%s1 + $0x128] sm:$0xff]
  %v57 = vld [vmem:[%s1 + $0x130] sm:$0xff]
  %v58 = vld [vmem:[%s1 + $0x138] sm:$0xff]
  %v59 = vld [vmem:[%s1 + $0x140] sm:$0xff]
  %v60 = vld [vmem:[%s1 + $0x148] sm:$0xff]
  %v61 = vld [vmem:[%s1 + $0x150] sm:$0xff]
  %v62 = vld [vmem:[%s1 + $0x158] sm:$0xff]
  %v63 = vld [vmem:[%s1 + $0x160] sm:$0xff]
  %v64 = vld [vmem:[%s1 + $0x168] sm:$0xff]
  %v65 = vld [vmem:[%s1 + $0x170] sm:$0xff]
  %v66 = vld [vmem:[%s1 + $0x178] sm:$0xff]
  %v67 = vld [vmem:[%s2] sm:$0x1]
  %v69 = vlaneseq
  %v70 = vshrl.u32 %v69, 7
  %v71 = vsub.s32 0, %v70
  %v72 = vrot.slane %v67, %v71
  %v74 = vld [vmem:[#allocation2] sm:$0xff]
  %v75 = vld [vmem:[%s0] sm:$0xff]
  %v76 = vld [vmem:[%s0 + $0x8] sm:$0xff]
  %v77 = vld [vmem:[%s0 + $0x10] sm:$0xff]
  %78 = vmatprep.subr.mxu0 %v20
  %79 = vmatpush1.msra.mxu0 %v19
  %80 = vmatprep.subr.mxu0 %v23
  %81 = vmatpush1.msra.mxu0 %v22
  %82 = vmatprep.subr.mxu0 %v26
  %83 = vmatpush1.msra.mxu0 %v25
  %84 = vmatprep.subr.mxu0 %v29
  %85 = vmatpush1.msra.mxu0 %v28
  %86 = vmatprep.subr.mxu0 %v32
  %87 = vmatpush1.msra.mxu0 %v31
  %88 = vmatprep.subr.mxu0 %v35
  %89 = vmatpush1.msra.mxu0 %v34
  %90 = vmatprep.subr.mxu0 %v38
  %91 = vmatpush1.msra.mxu0 %v37
  %92 = vmatprep.subr.mxu0 %v41
  %93 = vmatpush1.msra.mxu0 %v40
  %94 = vmatprep.subr.mxu0 %v44
  %95 = vmatpush1.msra.mxu0 %v43
  %96 = vmatprep.subr.mxu0 %v47
  %97 = vmatpush1.msra.mxu0 %v46
  %98 = vmatprep.subr.mxu0 %v50
  %99 = vmatpush1.msra.mxu0 %v49
  %100 = vmatprep.subr.mxu0 %v53
  %101 = vmatpush1.msra.mxu0 %v52
  %102 = vmatprep.subr.mxu0 %v56
  %103 = vmatpush1.msra.mxu0 %v55
  %104 = vmatprep.subr.mxu0 %v59
  %105 = vmatpush1.msra.mxu0 %v58
  %106 = vmatprep.subr.mxu0 %v62
  %107 = vmatpush1.msra.mxu0 %v61
  %108 = vmatprep.subr.mxu0 %v65
  %109 = vmatpush1.msra.mxu0 %v64
  %110 = vmatprep.subr.mxu0 0.0
  %111 = vmatpush1.msra.mxu0 0.0
  %112 = vmatprep.subr.mxu0 0.0
  %113 = vmatpush1.msra.mxu0 0.0
  %114 = vmatprep.subr.mxu0 0.0
  %115 = vmatpush1.msra.mxu0 0.0
  %116 = vmatprep.subr.mxu0 0.0
  %117 = vmatpush1.msra.mxu0 0.0
  %118 = vmatprep.subr.mxu0 0.0
  %119 = vmatpush1.msra.mxu0 0.0
  %120 = vmatprep.subr.mxu0 0.0
  %121 = vmatpush1.msra.mxu0 0.0
  %122 = vmatprep.subr.mxu0 0.0
  %123 = vmatpush1.msra.mxu0 0.0
  %124 = vmatprep.subr.mxu0 0.0
  %125 = vmatpush1.msra.mxu0 0.0
  %126 = vmatprep.subr.mxu0 0.0
  %127 = vmatpush1.msra.mxu0 0.0
  %128 = vmatprep.subr.mxu0 0.0
  %129 = vmatpush1.msra.mxu0 0.0
  %130 = vmatprep.subr.mxu0 0.0
  %131 = vmatpush1.msra.mxu0 0.0
  %132 = vmatprep.subr.mxu0 0.0
  %133 = vmatpush1.msra.mxu0 0.0
  %134 = vmatprep.subr.mxu0 0.0
  %135 = vmatpush1.msra.mxu0 0.0
  %136 = vmatprep.subr.mxu0 0.0
  %137 = vmatpush1.msra.mxu0 0.0
  %138 = vmatprep.subr.mxu0 0.0
  %139 = vmatpush1.msra.mxu0 0.0
  %140 = vmatprep.subr.mxu0 0.0
  %141 = vmatpush1.msra.mxu0 0.0
  %142 = vmatprep.mubr.f32.mxu0 0.0
  %143 = vmatmul.mubr.f32.gmra.mrb[0].mxu0 %v74
  %v144 = vpop.f32.mrb[0].mxu0
  %v145 = vadd.f32 0.0, %v144
  %v146 = vpop.f32.mrb[0].mxu0
  %v147 = vadd.f32 0.0, %v146
  %148 = vdwg.mxu0
  %149 = vmatprep.subr.mxu0 0.0
  %150 = vmatpush1.msra.mxu0 %v21
  %151 = vmatprep.subr.mxu0 0.0
  %152 = vmatpush1.msra.mxu0 %v24
  %153 = vmatprep.subr.mxu0 0.0
  %154 = vmatpush1.msra.mxu0 %v27
  %155 = vmatprep.subr.mxu0 0.0
  %156 = vmatpush1.msra.mxu0 %v30
  %157 = vmatprep.subr.mxu0 0.0
  %158 = vmatpush1.msra.mxu0 %v33
  %159 = vmatprep.subr.mxu0 0.0
  %160 = vmatpush1.msra.mxu0 %v36
  %161 = vmatprep.subr.mxu0 0.0
  %162 = vmatpush1.msra.mxu0 %v39
  %163 = vmatprep.subr.mxu0 0.0
  %164 = vmatpush1.msra.mxu0 %v42
  %165 = vmatprep.subr.mxu0 0.0
  %166 = vmatpush1.msra.mxu0 %v45
  %167 = vmatprep.subr.mxu0 0.0
  %168 = vmatpush1.msra.mxu0 %v48
  %169 = vmatprep.subr.mxu0 0.0
  %170 = vmatpush1.msra.mxu0 %v51
  %171 = vmatprep.subr.mxu0 0.0
  %172 = vmatpush1.msra.mxu0 %v54
  %173 = vmatprep.subr.mxu0 0.0
  %174 = vmatpush1.msra.mxu0 %v57
  %175 = vmatprep.subr.mxu0 0.0
  %176 = vmatpush1.msra.mxu0 %v60
  %177 = vmatprep.subr.mxu0 0.0
  %178 = vmatpush1.msra.mxu0 %v63
  %179 = vmatprep.subr.mxu0 0.0
  %180 = vmatpush1.msra.mxu0 %v66
  %181 = vmatprep.subr.mxu0 0.0
  %182 = vmatpush1.msra.mxu0 0.0
  %183 = vmatprep.subr.mxu0 0.0
  %184 = vmatpush1.msra.mxu0 0.0
  %185 = vmatprep.subr.mxu0 0.0
  %186 = vmatpush1.msra.mxu0 0.0
  %187 = vmatprep.subr.mxu0 0.0
  %188 = vmatpush1.msra.mxu0 0.0
  %189 = vmatprep.subr.mxu0 0.0
  %190 = vmatpush1.msra.mxu0 0.0
  %191 = vmatprep.subr.mxu0 0.0
  %192 = vmatpush1.msra.mxu0 0.0
  %193 = vmatprep.subr.mxu0 0.0
  %194 = vmatpush1.msra.mxu0 0.0
  %195 = vmatprep.subr.mxu0 0.0
  %196 = vmatpush1.msra.mxu0 0.0
  %197 = vmatprep.subr.mxu0 0.0
  %198 = vmatpush1.msra.mxu0 0.0
  %199 = vmatprep.subr.mxu0 0.0
  %200 = vmatpush1.msra.mxu0 0.0
  %201 = vmatprep.subr.mxu0 0.0
  %202 = vmatpush1.msra.mxu0 0.0
  %203 = vmatprep.subr.mxu0 0.0
  %204 = vmatpush1.msra.mxu0 0.0
  %205 = vmatprep.subr.mxu0 0.0
  %206 = vmatpush1.msra.mxu0 0.0
  %207 = vmatprep.subr.mxu0 0.0
  %208 = vmatpush1.msra.mxu0 0.0
  %209 = vmatprep.subr.mxu0 0.0
  %210 = vmatpush1.msra.mxu0 0.0
  %211 = vmatprep.subr.mxu0 0.0
  %212 = vmatpush1.msra.mxu0 0.0
  %213 = vmatprep.mubr.f32.mxu0 0.0
  %214 = vmatmul.mubr.f32.gmra.mrb[0].mxu0 %v74
  %v215 = vpop.f32.mrb[0].mxu0
  %v216 = vadd.f32 0.0, %v215
  %v217 = vpop.f32.mrb[0].mxu0
  %218 = vdwg.mxu0
  %v219 = vadd.f32 %v75, %v145
  %v220 = vxor.u32 %v219, 2147483648
  %v221 = vmul.f32 %v220, 1.442695
  %v222 = vpow.pop %v221
  %v223 = vadd.f32 %v222, 1.0
  %v224 = vrcp.pop %v223
  %v225 = vmul.f32 1.0, %v224
  %v226 = vadd.f32 %v76, %v147
  %v227 = vxor.u32 %v226, 2147483648
  %v228 = vmul.f32 %v227, 1.442695
  %v229 = vpow.pop %v228
  %v230 = vadd.f32 %v229, 1.0
  %v231 = vrcp.pop %v230
  %v232 = vmul.f32 1.0, %v231
  %v233 = vadd.f32 %v216, %v72
  %v234 = vmul.f32 %v225, %v233
  %v235 = vadd.f32 %v77, %v234
  %v236 = vtanh.pop %v235
  %v237 = vsub.f32 1.0, %v232
  %v238 = vmul.f32 %v237, %v236
  %v239 = vmul.f32 %v232, %v74
  %v240 = vadd.f32 %v238, %v239
  %241 = vst [vmem:[%s3] sm:$0xff] %v240
  %s242 = scalar_lea.vmem %s0, 24
  %v243 = vld [vmem:[%s242] sm:$0xff]
  %v244 = vld [vmem:[%s242 + $0x8] sm:$0xff]
  %v245 = vld [vmem:[%s242 + $0x10] sm:$0xff]
  %246 = vmatprep.subr.mxu0 %v20
  %247 = vmatpush1.msra.mxu0 %v19
  %248 = vmatprep.subr.mxu0 %v23
  %249 = vmatpush1.msra.mxu0 %v22
  %250 = vmatprep.subr.mxu0 %v26
  %251 = vmatpush1.msra.mxu0 %v25
  %252 = vmatprep.subr.mxu0 %v29
  %253 = vmatpush1.msra.mxu0 %v28
  %254 = vmatprep.subr.mxu0 %v32
  %255 = vmatpush1.msra.mxu0 %v31
  %256 = vmatprep.subr.mxu0 %v35
  %257 = vmatpush1.msra.mxu0 %v34
  %258 = vmatprep.subr.mxu0 %v38
  %259 = vmatpush1.msra.mxu0 %v37
  %260 = vmatprep.subr.mxu0 %v41
  %261 = vmatpush1.msra.mxu0 %v40
  %262 = vmatprep.subr.mxu0 %v44
  %263 = vmatpush1.msra.mxu0 %v43
  %264 = vmatprep.subr.mxu0 %v47
  %265 = vmatpush1.msra.mxu0 %v46
  %266 = vmatprep.subr.mxu0 %v50
  %267 = vmatpush1.msra.mxu0 %v49
  %268 = vmatprep.subr.mxu0 %v53
  %269 = vmatpush1.msra.mxu0 %v52
  %270 = vmatprep.subr.mxu0 %v56
  %271 = vmatpush1.msra.mxu0 %v55
  %272 = vmatprep.subr.mxu0 %v59
  %273 = vmatpush1.msra.mxu0 %v58
  %274 = vmatprep.subr.mxu0 %v62
  %275 = vmatpush1.msra.mxu0 %v61
  %276 = vmatprep.subr.mxu0 %v65
  %277 = vmatpush1.msra.mxu0 %v64
  %278 = vmatprep.subr.mxu0 0.0
  %279 = vmatpush1.msra.mxu0 0.0
  %280 = vmatprep.subr.mxu0 0.0
  %281 = vmatpush1.msra.mxu0 0.0
  %282 = vmatprep.subr.mxu0 0.0
  %283 = vmatpush1.msra.mxu0 0.0
  %284 = vmatprep.subr.mxu0 0.0
  %285 = vmatpush1.msra.mxu0 0.0
  %286 = vmatprep.subr.mxu0 0.0
  %287 = vmatpush1.msra.mxu0 0.0
  %288 = vmatprep.subr.mxu0 0.0
  %289 = vmatpush1.msra.mxu0 0.0
  %290 = vmatprep.subr.mxu0 0.0
  %291 = vmatpush1.msra.mxu0 0.0
  %292 = vmatprep.subr.mxu0 0.0
  %293 = vmatpush1.msra.mxu0 0.0
  %294 = vmatprep.subr.mxu0 0.0
  %295 = vmatpush1.msra.mxu0 0.0
  %296 = vmatprep.subr.mxu0 0.0
  %297 = vmatpush1.msra.mxu0 0.0
  %298 = vmatprep.subr.mxu0 0.0
  %299 = vmatpush1.msra.mxu0 0.0
  %300 = vmatprep.subr.mxu0 0.0
  %301 = vmatpush1.msra.mxu0 0.0
  %302 = vmatprep.subr.mxu0 0.0
  %303 = vmatpush1.msra.mxu0 0.0
  %304 = vmatprep.subr.mxu0 0.0
  %305 = vmatpush1.msra.mxu0 0.0
  %306 = vmatprep.subr.mxu0 0.0
  %307 = vmatpush1.msra.mxu0 0.0
  %308 = vmatprep.subr.mxu0 0.0
  %309 = vmatpush1.msra.mxu0 0.0
  %310 = vmatprep.mubr.f32.mxu0 0.0
  %311 = vmatmul.mubr.f32.gmra.mrb[0].mxu0 %v240
  %v312 = vpop.f32.mrb[0].mxu0
  %v313 = vadd.f32 0.0, %v312
  %v314 = vpop.f32.mrb[0].mxu0
  %v315 = vadd.f32 0.0, %v314
  %316 = vdwg.mxu0
  %317 = vmatprep.subr.mxu0 0.0
  %318 = vmatpush1.msra.mxu0 %v21
  %319 = vmatprep.subr.mxu0 0.0
  %320 = vmatpush1.msra.mxu0 %v24
  %321 = vmatprep.subr.mxu0 0.0
  %322 = vmatpush1.msra.mxu0 %v27
  %323 = vmatprep.subr.mxu0 0.0
  %324 = vmatpush1.msra.mxu0 %v30
  %325 = vmatprep.subr.mxu0 0.0
  %326 = vmatpush1.msra.mxu0 %v33
  %327 = vmatprep.subr.mxu0 0.0
  %328 = vmatpush1.msra.mxu0 %v36
  %329 = vmatprep.subr.mxu0 0.0
  %330 = vmatpush1.msra.mxu0 %v39
  %331 = vmatprep.subr.mxu0 0.0
  %332 = vmatpush1.msra.mxu0 %v42
  %333 = vmatprep.subr.mxu0 0.0
  %334 = vmatpush1.msra.mxu0 %v45
  %335 = vmatprep.subr.mxu0 0.0
  %336 = vmatpush1.msra.mxu0 %v48
  %337 = vmatprep.subr.mxu0 0.0
  %338 = vmatpush1.msra.mxu0 %v51
  %339 = vmatprep.subr.mxu0 0.0
  %340 = vmatpush1.msra.mxu0 %v54
  %341 = vmatprep.subr.mxu0 0.0
  %342 = vmatpush1.msra.mxu0 %v57
  %343 = vmatprep.subr.mxu0 0.0
  %344 = vmatpush1.msra.mxu0 %v60
  %345 = vmatprep.subr.mxu0 0.0
  %346 = vmatpush1.msra.mxu0 %v63
  %347 = vmatprep.subr.mxu0 0.0
  %348 = vmatpush1.msra.mxu0 %v66
  %349 = vmatprep.subr.mxu0 0.0
  %350 = vmatpush1.msra.mxu0 0.0
  %351 = vmatprep.subr.mxu0 0.0
  %352 = vmatpush1.msra.mxu0 0.0
  %353 = vmatprep.subr.mxu0 0.0
  %354 = vmatpush1.msra.mxu0 0.0
  %355 = vmatprep.subr.mxu0 0.0
  %356 = vmatpush1.msra.mxu0 0.0
  %357 = vmatprep.subr.mxu0 0.0
  %358 = vmatpush1.msra.mxu0 0.0
  %359 = vmatprep.subr.mxu0 0.0
  %360 = vmatpush1.msra.mxu0 0.0
  %361 = vmatprep.subr.mxu0 0.0
  %362 = vmatpush1.msra.mxu0 0.0
  %363 = vmatprep.subr.mxu0 0.0
  %364 = vmatpush1.msra.mxu0 0.0
  %365 = vmatprep.subr.mxu0 0.0
  %366 = vmatpush1.msra.mxu0 0.0
  %367 = vmatprep.subr.mxu0 0.0
  %368 = vmatpush1.msra.mxu0 0.0
  %369 = vmatprep.subr.mxu0 0.0
  %370 = vmatpush1.msra.mxu0 0.0
  %371 = vmatprep.subr.mxu0 0.0
  %372 = vmatpush1.msra.mxu0 0.0
  %373 = vmatprep.subr.mxu0 0.0
  %374 = vmatpush1.msra.mxu0 0.0
  %375 = vmatprep.subr.mxu0 0.0
  %376 = vmatpush1.msra.mxu0 0.0
  %377 = vmatprep.subr.mxu0 0.0
  %378 = vmatpush1.msra.mxu0 0.0
  %379 = vmatprep.subr.mxu0 0.0
  %380 = vmatpush1.msra.mxu0 0.0
  %381 = vmatprep.mubr.f32.mxu0 0.0
  %382 = vmatmul.mubr.f32.gmra.mrb[0].mxu0 %v240
  %v383 = vpop.f32.mrb[0].mxu0
  %v384 = vadd.f32 0.0, %v383
  %v385 = vpop.f32.mrb[0].mxu0
  %386 = vdwg.mxu0
  %v387 = vadd.f32 %v243, %v313
  %v388 = vxor.u32 %v387, 2147483648
  %v389 = vmul.f32 %v388, 1.442695
  %v390 = vpow.pop %v389
  %v391 = vadd.f32 %v390, 1.0
  %v392 = vrcp.pop %v391
  %v393 = vmul.f32 1.0, %v392
  %v394 = vadd.f32 %v244, %v315
  %v395 = vxor.u32 %v394, 2147483648
  %v396 = vmul.f32 %v395, 1.442695
  %v397 = vpow.pop %v396
  %v398 = vadd.f32 %v397, 1.0
  %v399 = vrcp.pop %v398
  %v400 = vmul.f32 1.0, %v399
  %v401 = vadd.f32 %v384, %v72
  %v402 = vmul.f32 %v393, %v401
  %v403 = vadd.f32 %v245, %v402
  %v404 = vtanh.pop %v403
  %v405 = vsub.f32 1.0, %v400
  %v406 = vmul.f32 %v405, %v404
  %v407 = vmul.f32 %v400, %v240
  %v408 = vadd.f32 %v406, %v407
  %s409 = scalar_lea.vmem %s3, 8
  %410 = vst [vmem:[%s409] sm:$0xff] %v408
  %s411 = scalar_lea.vmem %s0, 48
  %v412 = vld [vmem:[%s411] sm:$0xff]
  %v413 = vld [vmem:[%s411 + $0x8] sm:$0xff]
  %v414 = vld [vmem:[%s411 + $0x10] sm:$0xff]
  %415 = vmatprep.subr.mxu0 %v20
  %416 = vmatpush1.msra.mxu0 %v19
  %417 = vmatprep.subr.mxu0 %v23
  %418 = vmatpush1.msra.mxu0 %v22
  %419 = vmatprep.subr.mxu0 %v26
  %420 = vmatpush1.msra.mxu0 %v25
  %421 = vmatprep.subr.mxu0 %v29
  %422 = vmatpush1.msra.mxu0 %v28
  %423 = vmatprep.subr.mxu0 %v32
  %424 = vmatpush1.msra.mxu0 %v31
  %425 = vmatprep.subr.mxu0 %v35
  %426 = vmatpush1.msra.mxu0 %v34
  %427 = vmatprep.subr.mxu0 %v38
  %428 = vmatpush1.msra.mxu0 %v37
  %429 = vmatprep.subr.mxu0 %v41
  %430 = vmatpush1.msra.mxu0 %v40
  %431 = vmatprep.subr.mxu0 %v44
  %432 = vmatpush1.msra.mxu0 %v43
  %433 = vmatprep.subr.mxu0 %v47
  %434 = vmatpush1.msra.mxu0 %v46
  %435 = vmatprep.subr.mxu0 %v50
  %436 = vmatpush1.msra.mxu0 %v49
  %437 = vmatprep.subr.mxu0 %v53
  %438 = vmatpush1.msra.mxu0 %v52
  %439 = vmatprep.subr.mxu0 %v56
  %440 = vmatpush1.msra.mxu0 %v55
  %441 = vmatprep.subr.mxu0 %v59
  %442 = vmatpush1.msra.mxu0 %v58
  %443 = vmatprep.subr.mxu0 %v62
  %444 = vmatpush1.msra.mxu0 %v61
  %445 = vmatprep.subr.mxu0 %v65
  %446 = vmatpush1.msra.mxu0 %v64
  %447 = vmatprep.subr.mxu0 0.0
  %448 = vmatpush1.msra.mxu0 0.0
  %449 = vmatprep.subr.mxu0 0.0
  %450 = vmatpush1.msra.mxu0 0.0
  %451 = vmatprep.subr.mxu0 0.0
  %452 = vmatpush1.msra.mxu0 0.0
  %453 = vmatprep.subr.mxu0 0.0
  %454 = vmatpush1.msra.mxu0 0.0
  %455 = vmatprep.subr.mxu0 0.0
  %456 = vmatpush1.msra.mxu0 0.0
  %457 = vmatprep.subr.mxu0 0.0
  %458 = vmatpush1.msra.mxu0 0.0
  %459 = vmatprep.subr.mxu0 0.0
  %460 = vmatpush1.msra.mxu0 0.0
  %461 = vmatprep.subr.mxu0 0.0
  %462 = vmatpush1.msra.mxu0 0.0
  %463 = vmatprep.subr.mxu0 0.0
  %464 = vmatpush1.msra.mxu0 0.0
  %465 = vmatprep.subr.mxu0 0.0
  %466 = vmatpush1.msra.mxu0 0.0
  %467 = vmatprep.subr.mxu0 0.0
  %468 = vmatpush1.msra.mxu0 0.0
  %469 = vmatprep.subr.mxu0 0.0
  %470 = vmatpush1.msra.mxu0 0.0
  %471 = vmatprep.subr.mxu0 0.0
  %472 = vmatpush1.msra.mxu0 0.0
  %473 = vmatprep.subr.mxu0 0.0
  %474 = vmatpush1.msra.mxu0 0.0
  %475 = vmatprep.subr.mxu0 0.0
  %476 = vmatpush1.msra.mxu0 0.0
  %477 = vmatprep.subr.mxu0 0.0
  %478 = vmatpush1.msra.mxu0 0.0
  %479 = vmatprep.mubr.f32.mxu0 0.0
  %480 = vmatmul.mubr.f32.gmra.mrb[0].mxu0 %v408
  %v481 = vpop.f32.mrb[0].mxu0
  %v482 = vadd.f32 0.0, %v481
  %v483 = vpop.f32.mrb[0].mxu0
  %v484 = vadd.f32 0.0, %v483
  %485 = vdwg.mxu0
  %486 = vmatprep.subr.mxu0 0.0
  %487 = vmatpush1.msra.mxu0 %v21
  %488 = vmatprep.subr.mxu0 0.0
  %489 = vmatpush1.msra.mxu0 %v24
  %490 = vmatprep.subr.mxu0 0.0
  %491 = vmatpush1.msra.mxu0 %v27
  %492 = vmatprep.subr.mxu0 0.0
  %493 = vmatpush1.msra.mxu0 %v30
  %494 = vmatprep.subr.mxu0 0.0
  %495 = vmatpush1.msra.mxu0 %v33
  %496 = vmatprep.subr.mxu0 0.0
  %497 = vmatpush1.msra.mxu0 %v36
  %498 = vmatprep.subr.mxu0 0.0
  %499 = vmatpush1.msra.mxu0 %v39
  %500 = vmatprep.subr.mxu0 0.0
  %501 = vmatpush1.msra.mxu0 %v42
  %502 = vmatprep.subr.mxu0 0.0
  %503 = vmatpush1.msra.mxu0 %v45
  %504 = vmatprep.subr.mxu0 0.0
  %505 = vmatpush1.msra.mxu0 %v48
  %506 = vmatprep.subr.mxu0 0.0
  %507 = vmatpush1.msra.mxu0 %v51
  %508 = vmatprep.subr.mxu0 0.0
  %509 = vmatpush1.msra.mxu0 %v54
  %510 = vmatprep.subr.mxu0 0.0
  %511 = vmatpush1.msra.mxu0 %v57
  %512 = vmatprep.subr.mxu0 0.0
  %513 = vmatpush1.msra.mxu0 %v60
  %514 = vmatprep.subr.mxu0 0.0
  %515 = vmatpush1.msra.mxu0 %v63
  %516 = vmatprep.subr.mxu0 0.0
  %517 = vmatpush1.msra.mxu0 %v66
  %518 = vmatprep.subr.mxu0 0.0
  %519 = vmatpush1.msra.mxu0 0.0
  %520 = vmatprep.subr.mxu0 0.0
  %521 = vmatpush1.msra.mxu0 0.0
  %522 = vmatprep.subr.mxu0 0.0
  %523 = vmatpush1.msra.mxu0 0.0
  %524 = vmatprep.subr.mxu0 0.0
  %525 = vmatpush1.msra.mxu0 0.0
  %526 = vmatprep.subr.mxu0 0.0
  %527 = vmatpush1.msra.mxu0 0.0
  %528 = vmatprep.subr.mxu0 0.0
  %529 = vmatpush1.msra.mxu0 0.0
  %530 = vmatprep.subr.mxu0 0.0
  %531 = vmatpush1.msra.mxu0 0.0
  %532 = vmatprep.subr.mxu0 0.0
  %533 = vmatpush1.msra.mxu0 0.0
  %534 = vmatprep.subr.mxu0 0.0
  %535 = vmatpush1.msra.mxu0 0.0
  %536 = vmatprep.subr.mxu0 0.0
  %537 = vmatpush1.msra.mxu0 0.0
  %538 = vmatprep.subr.mxu0 0.0
  %539 = vmatpush1.msra.mxu0 0.0
  %540 = vmatprep.subr.mxu0 0.0
  %541 = vmatpush1.msra.mxu0 0.0
  %542 = vmatprep.subr.mxu0 0.0
  %543 = vmatpush1.msra.mxu0 0.0
  %544 = vmatprep.subr.mxu0 0.0
  %545 = vmatpush1.msra.mxu0 0.0
  %546 = vmatprep.subr.mxu0 0.0
  %547 = vmatpush1.msra.mxu0 0.0
  %548 = vmatprep.subr.mxu0 0.0
  %549 = vmatpush1.msra.mxu0 0.0
  %550 = vmatprep.mubr.f32.mxu0 0.0
  %551 = vmatmul.mubr.f32.gmra.mrb[0].mxu0 %v408
  %v552 = vpop.f32.mrb[0].mxu0
  %v553 = vadd.f32 0.0, %v552
  %v554 = vpop.f32.mrb[0].mxu0
  %555 = vdwg.mxu0
  %v556 = vadd.f32 %v412, %v482
  %v557 = vxor.u32 %v556, 2147483648
  %v558 = vmul.f32 %v557, 1.442695
  %v559 = vpow.pop %v558
  %v560 = vadd.f32 %v559, 1.0
  %v561 = vrcp.pop %v560
  %v562 = vmul.f32 1.0, %v561
  %v563 = vadd.f32 %v413, %v484
  %v564 = vxor.u32 %v563, 2147483648
  %v565 = vmul.f32 %v564, 1.442695
  %v566 = vpow.pop %v565
  %v567 = vadd.f32 %v566, 1.0
  %v568 = vrcp.pop %v567
  %v569 = vmul.f32 1.0, %v568
  %v570 = vadd.f32 %v553, %v72
  %v571 = vmul.f32 %v562, %v570
  %v572 = vadd.f32 %v414, %v571
  %v573 = vtanh.pop %v572
  %v574 = vsub.f32 1.0, %v569
  %v575 = vmul.f32 %v574, %v573
  %v576 = vmul.f32 %v569, %v408
  %v577 = vadd.f32 %v575, %v576
  %s578 = scalar_lea.vmem %s3, 16
  %579 = vst [vmem:[%s578] sm:$0xff] %v577
  %s580 = scalar_lea.vmem %s0, 72
  %v581 = vld [vmem:[%s580] sm:$0xff]
  %v582 = vld [vmem:[%s580 + $0x8] sm:$0xff]
  %v583 = vld [vmem:[%s580 + $0x10] sm:$0xff]
  %584 = vmatprep.subr.mxu0 %v20
  %585 = vmatpush1.msra.mxu0 %v19
  %586 = vmatprep.subr.mxu0 %v23
  %587 = vmatpush1.msra.mxu0 %v22
  %588 = vmatprep.subr.mxu0 %v26
  %589 = vmatpush1.msra.mxu0 %v25
  %590 = vmatprep.subr.mxu0 %v29
  %591 = vmatpush1.msra.mxu0 %v28
  %592 = vmatprep.subr.mxu0 %v32
  %593 = vmatpush1.msra.mxu0 %v31
  %594 = vmatprep.subr.mxu0 %v35
  %595 = vmatpush1.msra.mxu0 %v34
  %596 = vmatprep.subr.mxu0 %v38
  %597 = vmatpush1.msra.mxu0 %v37
  %598 = vmatprep.subr.mxu0 %v41
  %599 = vmatpush1.msra.mxu0 %v40
  %600 = vmatprep.subr.mxu0 %v44
  %601 = vmatpush1.msra.mxu0 %v43
  %602 = vmatprep.subr.mxu0 %v47
  %603 = vmatpush1.msra.mxu0 %v46
  %604 = vmatprep.subr.mxu0 %v50
  %605 = vmatpush1.msra.mxu0 %v49
  %606 = vmatprep.subr.mxu0 %v53
  %607 = vmatpush1.msra.mxu0 %v52
  %608 = vmatprep.subr.mxu0 %v56
  %609 = vmatpush1.msra.mxu0 %v55
  %610 = vmatprep.subr.mxu0 %v59
  %611 = vmatpush1.msra.mxu0 %v58
  %612 = vmatprep.subr.mxu0 %v62
  %613 = vmatpush1.msra.mxu0 %v61
  %614 = vmatprep.subr.mxu0 %v65
  %615 = vmatpush1.msra.mxu0 %v64
  %616 = vmatprep.subr.mxu0 0.0
  %617 = vmatpush1.msra.mxu0 0.0
  %618 = vmatprep.subr.mxu0 0.0
  %619 = vmatpush1.msra.mxu0 0.0
  %620 = vmatprep.subr.mxu0 0.0
  %621 = vmatpush1.msra.mxu0 0.0
  %622 = vmatprep.subr.mxu0 0.0
  %623 = vmatpush1.msra.mxu0 0.0
  %624 = vmatprep.subr.mxu0 0.0
  %625 = vmatpush1.msra.mxu0 0.0
  %626 = vmatprep.subr.mxu0 0.0
  %627 = vmatpush1.msra.mxu0 0.0
  %628 = vmatprep.subr.mxu0 0.0
  %629 = vmatpush1.msra.mxu0 0.0
  %630 = vmatprep.subr.mxu0 0.0
  %631 = vmatpush1.msra.mxu0 0.0
  %632 = vmatprep.subr.mxu0 0.0
  %633 = vmatpush1.msra.mxu0 0.0
  %634 = vmatprep.subr.mxu0 0.0
  %635 = vmatpush1.msra.mxu0 0.0
  %636 = vmatprep.subr.mxu0 0.0
  %637 = vmatpush1.msra.mxu0 0.0
  %638 = vmatprep.subr.mxu0 0.0
  %639 = vmatpush1.msra.mxu0 0.0
  %640 = vmatprep.subr.mxu0 0.0
  %641 = vmatpush1.msra.mxu0 0.0
  %642 = vmatprep.subr.mxu0 0.0
  %643 = vmatpush1.msra.mxu0 0.0
  %644 = vmatprep.subr.mxu0 0.0
  %645 = vmatpush1.msra.mxu0 0.0
  %646 = vmatprep.subr.mxu0 0.0
  %647 = vmatpush1.msra.mxu0 0.0
  %648 = vmatprep.mubr.f32.mxu0 0.0
  %649 = vmatmul.mubr.f32.gmra.mrb[0].mxu0 %v577
  %v650 = vpop.f32.mrb[0].mxu0
  %v651 = vadd.f32 0.0, %v650
  %v652 = vpop.f32.mrb[0].mxu0
  %v653 = vadd.f32 0.0, %v652
  %654 = vdwg.mxu0
  %655 = vmatprep.subr.mxu0 0.0
  %656 = vmatpush1.msra.mxu0 %v21
  %657 = vmatprep.subr.mxu0 0.0
  %658 = vmatpush1.msra.mxu0 %v24
  %659 = vmatprep.subr.mxu0 0.0
  %660 = vmatpush1.msra.mxu0 %v27
  %661 = vmatprep.subr.mxu0 0.0
  %662 = vmatpush1.msra.mxu0 %v30
  %663 = vmatprep.subr.mxu0 0.0
  %664 = vmatpush1.msra.mxu0 %v33
  %665 = vmatprep.subr.mxu0 0.0
  %666 = vmatpush1.msra.mxu0 %v36
  %667 = vmatprep.subr.mxu0 0.0
  %668 = vmatpush1.msra.mxu0 %v39
  %669 = vmatprep.subr.mxu0 0.0
  %670 = vmatpush1.msra.mxu0 %v42
  %671 = vmatprep.subr.mxu0 0.0
  %672 = vmatpush1.msra.mxu0 %v45
  %673 = vmatprep.subr.mxu0 0.0
  %674 = vmatpush1.msra.mxu0 %v48
  %675 = vmatprep.subr.mxu0 0.0
  %676 = vmatpush1.msra.mxu0 %v51
  %677 = vmatprep.subr.mxu0 0.0
  %678 = vmatpush1.msra.mxu0 %v54
  %679 = vmatprep.subr.mxu0 0.0
  %680 = vmatpush1.msra.mxu0 %v57
  %681 = vmatprep.subr.mxu0 0.0
  %682 = vmatpush1.msra.mxu0 %v60
  %683 = vmatprep.subr.mxu0 0.0
  %684 = vmatpush1.msra.mxu0 %v63
  %685 = vmatprep.subr.mxu0 0.0
  %686 = vmatpush1.msra.mxu0 %v66
  %687 = vmatprep.subr.mxu0 0.0
  %688 = vmatpush1.msra.mxu0 0.0
  %689 = vmatprep.subr.mxu0 0.0
  %690 = vmatpush1.msra.mxu0 0.0
  %691 = vmatprep.subr.mxu0 0.0
  %692 = vmatpush1.msra.mxu0 0.0
  %693 = vmatprep.subr.mxu0 0.0
  %694 = vmatpush1.msra.mxu0 0.0
  %695 = vmatprep.subr.mxu0 0.0
  %696 = vmatpush1.msra.mxu0 0.0
  %697 = vmatprep.subr.mxu0 0.0
  %698 = vmatpush1.msra.mxu0 0.0
  %699 = vmatprep.subr.mxu0 0.0
  %700 = vmatpush1.msra.mxu0 0.0
  %701 = vmatprep.subr.mxu0 0.0
  %702 = vmatpush1.msra.mxu0 0.0
  %703 = vmatprep.subr.mxu0 0.0
  %704 = vmatpush1.msra.mxu0 0.0
  %705 = vmatprep.subr.mxu0 0.0
  %706 = vmatpush1.msra.mxu0 0.0
  %707 = vmatprep.subr.mxu0 0.0
  %708 = vmatpush1.msra.mxu0 0.0
  %709 = vmatprep.subr.mxu0 0.0
  %710 = vmatpush1.msra.mxu0 0.0
  %711 = vmatprep.subr.mxu0 0.0
  %712 = vmatpush1.msra.mxu0 0.0
  %713 = vmatprep.subr.mxu0 0.0
  %714 = vmatpush1.msra.mxu0 0.0
  %715 = vmatprep.subr.mxu0 0.0
  %716 = vmatpush1.msra.mxu0 0.0
  %717 = vmatprep.subr.mxu0 0.0
  %718 = vmatpush1.msra.mxu0 0.0
  %719 = vmatprep.mubr.f32.mxu0 0.0
  %720 = vmatmul.mubr.f32.gmra.mrb[0].mxu0 %v577
  %v721 = vpop.f32.mrb[0].mxu0
  %v722 = vadd.f32 0.0, %v721
  %v723 = vpop.f32.mrb[0].mxu0
  %724 = vdwg.mxu0
  %v725 = vadd.f32 %v581, %v651
  %v726 = vxor.u32 %v725, 2147483648
  %v727 = vmul.f32 %v726, 1.442695
  %v728 = vpow.pop %v727
  %v729 = vadd.f32 %v728, 1.0
  %v730 = vrcp.pop %v729
  %v731 = vmul.f32 1.0, %v730
  %v732 = vadd.f32 %v582, %v653
  %v733 = vxor.u32 %v732, 2147483648
  %v734 = vmul.f32 %v733, 1.442695
  %v735 = vpow.pop %v734
  %v736 = vadd.f32 %v735, 1.0
  %v737 = vrcp.pop %v736
  %v738 = vmul.f32 1.0, %v737
  %v739 = vadd.f32 %v722, %v72
  %v740 = vmul.f32 %v731, %v739
  %v741 = vadd.f32 %v583, %v740
  %v742 = vtanh.pop %v741
  %v743 = vsub.f32 1.0, %v738
  %v744 = vmul.f32 %v743, %v742
  %v745 = vmul.f32 %v738, %v577
  %v746 = vadd.f32 %v744, %v745
  %s747 = scalar_lea.vmem %s3, 24
  %748 = vst [vmem:[%s747] sm:$0xff] %v746
  %s749 = scalar_lea.vmem %s0, 96
  %v750 = vld [vmem:[%s749] sm:$0xff]
  %v751 = vld [vmem:[%s749 + $0x8] sm:$0xff]
  %v752 = vld [vmem:[%s749 + $0x10] sm:$0xff]
  %753 = vmatprep.subr.mxu0 %v20
  %754 = vmatpush1.msra.mxu0 %v19
  %755 = vmatprep.subr.mxu0 %v23
  %756 = vmatpush1.msra.mxu0 %v22
  %757 = vmatprep.subr.mxu0 %v26
  %758 = vmatpush1.msra.mxu0 %v25
  %759 = vmatprep.subr.mxu0 %v29
  %760 = vmatpush1.msra.mxu0 %v28
  %761 = vmatprep.subr.mxu0 %v32
  %762 = vmatpush1.msra.mxu0 %v31
  %763 = vmatprep.subr.mxu0 %v35
  %764 = vmatpush1.msra.mxu0 %v34
  %765 = vmatprep.subr.mxu0 %v38
  %766 = vmatpush1.msra.mxu0 %v37
  %767 = vmatprep.subr.mxu0 %v41
  %768 = vmatpush1.msra.mxu0 %v40
  %769 = vmatprep.subr.mxu0 %v44
  %770 = vmatpush1.msra.mxu0 %v43
  %771 = vmatprep.subr.mxu0 %v47
  %772 = vmatpush1.msra.mxu0 %v46
  %773 = vmatprep.subr.mxu0 %v50
  %774 = vmatpush1.msra.mxu0 %v49
  %775 = vmatprep.subr.mxu0 %v53
  %776 = vmatpush1.msra.mxu0 %v52
  %777 = vmatprep.subr.mxu0 %v56
  %778 = vmatpush1.msra.mxu0 %v55
  %779 = vmatprep.subr.mxu0 %v59
  %780 = vmatpush1.msra.mxu0 %v58
  %781 = vmatprep.subr.mxu0 %v62
  %782 = vmatpush1.msra.mxu0 %v61
  %783 = vmatprep.subr.mxu0 %v65
  %784 = vmatpush1.msra.mxu0 %v64
  %785 = vmatprep.subr.mxu0 0.0
  %786 = vmatpush1.msra.mxu0 0.0
  %787 = vmatprep.subr.mxu0 0.0
  %788 = vmatpush1.msra.mxu0 0.0
  %789 = vmatprep.subr.mxu0 0.0
  %790 = vmatpush1.msra.mxu0 0.0
  %791 = vmatprep.subr.mxu0 0.0
  %792 = vmatpush1.msra.mxu0 0.0
  %793 = vmatprep.subr.mxu0 0.0
  %794 = vmatpush1.msra.mxu0 0.0
  %795 = vmatprep.subr.mxu0 0.0
  %796 = vmatpush1.msra.mxu0 0.0
  %797 = vmatprep.subr.mxu0 0.0
  %798 = vmatpush1.msra.mxu0 0.0
  %799 = vmatprep.subr.mxu0 0.0
  %800 = vmatpush1.msra.mxu0 0.0
  %801 = vmatprep.subr.mxu0 0.0
  %802 = vmatpush1.msra.mxu0 0.0
  %803 = vmatprep.subr.mxu0 0.0
  %804 = vmatpush1.msra.mxu0 0.0
  %805 = vmatprep.subr.mxu0 0.0
  %806 = vmatpush1.msra.mxu0 0.0
  %807 = vmatprep.subr.mxu0 0.0
  %808 = vmatpush1.msra.mxu0 0.0
  %809 = vmatprep.subr.mxu0 0.0
  %810 = vmatpush1.msra.mxu0 0.0
  %811 = vmatprep.subr.mxu0 0.0
  %812 = vmatpush1.msra.mxu0 0.0
  %813 = vmatprep.subr.mxu0 0.0
  %814 = vmatpush1.msra.mxu0 0.0
  %815 = vmatprep.subr.mxu0 0.0
  %816 = vmatpush1.msra.mxu0 0.0
  %817 = vmatprep.mubr.f32.mxu0 0.0
  %818 = vmatmul.mubr.f32.gmra.mrb[0].mxu0 %v746
  %v819 = vpop.f32.mrb[0].mxu0
  %v820 = vadd.f32 0.0, %v819
  %v821 = vpop.f32.mrb[0].mxu0
  %v822 = vadd.f32 0.0, %v821
  %823 = vdwg.mxu0
  %824 = vmatprep.subr.mxu0 0.0
  %825 = vmatpush1.msra.mxu0 %v21
  %826 = vmatprep.subr.mxu0 0.0
  %827 = vmatpush1.msra.mxu0 %v24
  %828 = vmatprep.subr.mxu0 0.0
  %829 = vmatpush1.msra.mxu0 %v27
  %830 = vmatprep.subr.mxu0 0.0
  %831 = vmatpush1.msra.mxu0 %v30
  %832 = vmatprep.subr.mxu0 0.0
  %833 = vmatpush1.msra.mxu0 %v33
  %834 = vmatprep.subr.mxu0 0.0
  %835 = vmatpush1.msra.mxu0 %v36
  %836 = vmatprep.subr.mxu0 0.0
  %837 = vmatpush1.msra.mxu0 %v39
  %838 = vmatprep.subr.mxu0 0.0
  %839 = vmatpush1.msra.mxu0 %v42
  %840 = vmatprep.subr.mxu0 0.0
  %841 = vmatpush1.msra.mxu0 %v45
  %842 = vmatprep.subr.mxu0 0.0
  %843 = vmatpush1.msra.mxu0 %v48
  %844 = vmatprep.subr.mxu0 0.0
  %845 = vmatpush1.msra.mxu0 %v51
  %846 = vmatprep.subr.mxu0 0.0
  %847 = vmatpush1.msra.mxu0 %v54
  %848 = vmatprep.subr.mxu0 0.0
  %849 = vmatpush1.msra.mxu0 %v57
  %850 = vmatprep.subr.mxu0 0.0
  %851 = vmatpush1.msra.mxu0 %v60
  %852 = vmatprep.subr.mxu0 0.0
  %853 = vmatpush1.msra.mxu0 %v63
  %854 = vmatprep.subr.mxu0 0.0
  %855 = vmatpush1.msra.mxu0 %v66
  %856 = vmatprep.subr.mxu0 0.0
  %857 = vmatpush1.msra.mxu0 0.0
  %858 = vmatprep.subr.mxu0 0.0
  %859 = vmatpush1.msra.mxu0 0.0
  %860 = vmatprep.subr.mxu0 0.0
  %861 = vmatpush1.msra.mxu0 0.0
  %862 = vmatprep.subr.mxu0 0.0
  %863 = vmatpush1.msra.mxu0 0.0
  %864 = vmatprep.subr.mxu0 0.0
  %865 = vmatpush1.msra.mxu0 0.0
  %866 = vmatprep.subr.mxu0 0.0
  %867 = vmatpush1.msra.mxu0 0.0
  %868 = vmatprep.subr.mxu0 0.0
  %869 = vmatpush1.msra.mxu0 0.0
  %870 = vmatprep.subr.mxu0 0.0
  %871 = vmatpush1.msra.mxu0 0.0
  %872 = vmatprep.subr.mxu0 0.0
  %873 = vmatpush1.msra.mxu0 0.0
  %874 = vmatprep.subr.mxu0 0.0
  %875 = vmatpush1.msra.mxu0 0.0
  %876 = vmatprep.subr.mxu0 0.0
  %877 = vmatpush1.msra.mxu0 0.0
  %878 = vmatprep.subr.mxu0 0.0
  %879 = vmatpush1.msra.mxu0 0.0
  %880 = vmatprep.subr.mxu0 0.0
  %881 = vmatpush1.msra.mxu0 0.0
  %882 = vmatprep.subr.mxu0 0.0
  %883 = vmatpush1.msra.mxu0 0.0
  %884 = vmatprep.subr.mxu0 0.0
  %885 = vmatpush1.msra.mxu0 0.0
  %886 = vmatprep.subr.mxu0 0.0
  %887 = vmatpush1.msra.mxu0 0.0
  %888 = vmatprep.mubr.f32.mxu0 0.0
  %889 = vmatmul.mubr.f32.gmra.mrb[0].mxu0 %v746
  %v890 = vpop.f32.mrb[0].mxu0
  %v891 = vadd.f32 0.0, %v890
  %v892 = vpop.f32.mrb[0].mxu0
  %893 = vdwg.mxu0
  %v894 = vadd.f32 %v750, %v820
  %v895 = vxor.u32 %v894, 2147483648
  %v896 = vmul.f32 %v895, 1.442695
  %v897 = vpow.pop %v896
  %v898 = vadd.f32 %v897, 1.0
  %v899 = vrcp.pop %v898
  %v900 = vmul.f32 1.0, %v899
  %v901 = vadd.f32 %v751, %v822
  %v902 = vxor.u32 %v901, 2147483648
  %v903 = vmul.f32 %v902, 1.442695
  %v904 = vpow.pop %v903
  %v905 = vadd.f32 %v904, 1.0
  %v906 = vrcp.pop %v905
  %v907 = vmul.f32 1.0, %v906
  %v908 = vadd.f32 %v891, %v72
  %v909 = vmul.f32 %v900, %v908
  %v910 = vadd.f32 %v752, %v909
  %v911 = vtanh.pop %v910
  %v912 = vsub.f32 1.0, %v907
  %v913 = vmul.f32 %v912, %v911
  %v914 = vmul.f32 %v907, %v746
  %v915 = vadd.f32 %v913, %v914
  %s916 = scalar_lea.vmem %s3, 32
  %917 = vst [vmem:[%s916] sm:$0xff] %v915
  %s918 = scalar_lea.vmem %s0, 120
  %v919 = vld [vmem:[%s918] sm:$0xff]
  %v920 = vld [vmem:[%s918 + $0x8] sm:$0xff]
  %v921 = vld [vmem:[%s918 + $0x10] sm:$0xff]
  %922 = vmatprep.subr.mxu0 %v20
  %923 = vmatpush1.msra.mxu0 %v19
  %924 = vmatprep.subr.mxu0 %v23
  %925 = vmatpush1.msra.mxu0 %v22
  %926 = vmatprep.subr.mxu0 %v26
  %927 = vmatpush1.msra.mxu0 %v25
  %928 = vmatprep.subr.mxu0 %v29
  %929 = vmatpush1.msra.mxu0 %v28
  %930 = vmatprep.subr.mxu0 %v32
  %931 = vmatpush1.msra.mxu0 %v31
  %932 = vmatprep.subr.mxu0 %v35
  %933 = vmatpush1.msra.mxu0 %v34
  %934 = vmatprep.subr.mxu0 %v38
  %935 = vmatpush1.msra.mxu0 %v37
  %936 = vmatprep.subr.mxu0 %v41
  %937 = vmatpush1.msra.mxu0 %v40
  %938 = vmatprep.subr.mxu0 %v44
  %939 = vmatpush1.msra.mxu0 %v43
  %940 = vmatprep.subr.mxu0 %v47
  %941 = vmatpush1.msra.mxu0 %v46
  %942 = vmatprep.subr.mxu0 %v50
  %943 = vmatpush1.msra.mxu0 %v49
  %944 = vmatprep.subr.mxu0 %v53
  %945 = vmatpush1.msra.mxu0 %v52
  %946 = vmatprep.subr.mxu0 %v56
  %947 = vmatpush1.msra.mxu0 %v55
  %948 = vmatprep.subr.mxu0 %v59
  %949 = vmatpush1.msra.mxu0 %v58
  %950 = vmatprep.subr.mxu0 %v62
  %951 = vmatpush1.msra.mxu0 %v61
  %952 = vmatprep.subr.mxu0 %v65
  %953 = vmatpush1.msra.mxu0 %v64
  %954 = vmatprep.subr.mxu0 0.0
  %955 = vmatpush1.msra.mxu0 0.0
  %956 = vmatprep.subr.mxu0 0.0
  %957 = vmatpush1.msra.mxu0 0.0
  %958 = vmatprep.subr.mxu0 0.0
  %959 = vmatpush1.msra.mxu0 0.0
  %960 = vmatprep.subr.mxu0 0.0
  %961 = vmatpush1.msra.mxu0 0.0
  %962 = vmatprep.subr.mxu0 0.0
  %963 = vmatpush1.msra.mxu0 0.0
  %964 = vmatprep.subr.mxu0 0.0
  %965 = vmatpush1.msra.mxu0 0.0
  %966 = vmatprep.subr.mxu0 0.0
  %967 = vmatpush1.msra.mxu0 0.0
  %968 = vmatprep.subr.mxu0 0.0
  %969 = vmatpush1.msra.mxu0 0.0
  %970 = vmatprep.subr.mxu0 0.0
  %971 = vmatpush1.msra.mxu0 0.0
  %972 = vmatprep.subr.mxu0 0.0
  %973 = vmatpush1.msra.mxu0 0.0
  %974 = vmatprep.subr.mxu0 0.0
  %975 = vmatpush1.msra.mxu0 0.0
  %976 = vmatprep.subr.mxu0 0.0
  %977 = vmatpush1.msra.mxu0 0.0
  %978 = vmatprep.subr.mxu0 0.0
  %979 = vmatpush1.msra.mxu0 0.0
  %980 = vmatprep.subr.mxu0 0.0
  %981 = vmatpush1.msra.mxu0 0.0
  %982 = vmatprep.subr.mxu0 0.0
  %983 = vmatpush1.msra.mxu0 0.0
  %984 = vmatprep.subr.mxu0 0.0
  %985 = vmatpush1.msra.mxu0 0.0
  %986 = vmatprep.mubr.f32.mxu0 0.0
  %987 = vmatmul.mubr.f32.gmra.mrb[0].mxu0 %v915
  %v988 = vpop.f32.mrb[0].mxu0
  %v989 = vadd.f32 0.0, %v988
  %v990 = vpop.f32.mrb[0].mxu0
  %v991 = vadd.f32 0.0, %v990
  %992 = vdwg.mxu0
  %993 = vmatprep.subr.mxu0 0.0
  %994 = vmatpush1.msra.mxu0 %v21
  %995 = vmatprep.subr.mxu0 0.0
  %996 = vmatpush1.msra.mxu0 %v24
  %997 = vmatprep.subr.mxu0 0.0
  %998 = vmatpush1.msra.mxu0 %v27
  %999 = vmatprep.subr.mxu0 0.0
  %1000 = vmatpush1.msra.mxu0 %v30
  %1001 = vmatprep.subr.mxu0 0.0
  %1002 = vmatpush1.msra.mxu0 %v33
  %1003 = vmatprep.subr.mxu0 0.0
  %1004 = vmatpush1.msra.mxu0 %v36
  %1005 = vmatprep.subr.mxu0 0.0
  %1006 = vmatpush1.msra.mxu0 %v39
  %1007 = vmatprep.subr.mxu0 0.0
  %1008 = vmatpush1.msra.mxu0 %v42
  %1009 = vmatprep.subr.mxu0 0.0
  %1010 = vmatpush1.msra.mxu0 %v45
  %1011 = vmatprep.subr.mxu0 0.0
  %1012 = vmatpush1.msra.mxu0 %v48
  %1013 = vmatprep.subr.mxu0 0.0
  %1014 = vmatpush1.msra.mxu0 %v51
  %1015 = vmatprep.subr.mxu0 0.0
  %1016 = vmatpush1.msra.mxu0 %v54
  %1017 = vmatprep.subr.mxu0 0.0
  %1018 = vmatpush1.msra.mxu0 %v57
  %1019 = vmatprep.subr.mxu0 0.0
  %1020 = vmatpush1.msra.mxu0 %v60
  %1021 = vmatprep.subr.mxu0 0.0
  %1022 = vmatpush1.msra.mxu0 %v63
  %1023 = vmatprep.subr.mxu0 0.0
  %1024 = vmatpush1.msra.mxu0 %v66
  %1025 = vmatprep.subr.mxu0 0.0
  %1026 = vmatpush1.msra.mxu0 0.0
  %1027 = vmatprep.subr.mxu0 0.0
  %1028 = vmatpush1.msra.mxu0 0.0
  %1029 = vmatprep.subr.mxu0 0.0
  %1030 = vmatpush1.msra.mxu0 0.0
  %1031 = vmatprep.subr.mxu0 0.0
  %1032 = vmatpush1.msra.mxu0 0.0
  %1033 = vmatprep.subr.mxu0 0.0
  %1034 = vmatpush1.msra.mxu0 0.0
  %1035 = vmatprep.subr.mxu0 0.0
  %1036 = vmatpush1.msra.mxu0 0.0
  %1037 = vmatprep.subr.mxu0 0.0
  %1038 = vmatpush1.msra.mxu0 0.0
  %1039 = vmatprep.subr.mxu0 0.0
  %1040 = vmatpush1.msra.mxu0 0.0
  %1041 = vmatprep.subr.mxu0 0.0
  %1042 = vmatpush1.msra.mxu0 0.0
  %1043 = vmatprep.subr.mxu0 0.0
  %1044 = vmatpush1.msra.mxu0 0.0
  %1045 = vmatprep.subr.mxu0 0.0
  %1046 = vmatpush1.msra.mxu0 0.0
  %1047 = vmatprep.subr.mxu0 0.0
  %1048 = vmatpush1.msra.mxu0 0.0
  %1049 = vmatprep.subr.mxu0 0.0
  %1050 = vmatpush1.msra.mxu0 0.0
  %1051 = vmatprep.subr.mxu0 0.0
  %1052 = vmatpush1.msra.mxu0 0.0
  %1053 = vmatprep.subr.mxu0 0.0
  %1054 = vmatpush1.msra.mxu0 0.0
  %1055 = vmatprep.subr.mxu0 0.0
  %1056 = vmatpush1.msra.mxu0 0.0
  %1057 = vmatprep.mubr.f32.mxu0 0.0
  %1058 = vmatmul.mubr.f32.gmra.mrb[0].mxu0 %v915
  %v1059 = vpop.f32.mrb[0].mxu0
  %v1060 = vadd.f32 0.0, %v1059
  %v1061 = vpop.f32.mrb[0].mxu0
  %1062 = vdwg.mxu0
  %v1063 = vadd.f32 %v919, %v989
  %v1064 = vxor.u32 %v1063, 2147483648
  %v1065 = vmul.f32 %v1064, 1.442695
  %v1066 = vpow.pop %v1065
  %v1067 = vadd.f32 %v1066, 1.0
  %v1068 = vrcp.pop %v1067
  %v1069 = vmul.f32 1.0, %v1068
  %v1070 = vadd.f32 %v920, %v991
  %v1071 = vxor.u32 %v1070, 2147483648
  %v1072 = vmul.f32 %v1071, 1.442695
  %v1073 = vpow.pop %v1072
  %v1074 = vadd.f32 %v1073, 1.0
  %v1075 = vrcp.pop %v1074
  %v1076 = vmul.f32 1.0, %v1075
  %v1077 = vadd.f32 %v1060, %v72
  %v1078 = vmul.f32 %v1069, %v1077
  %v1079 = vadd.f32 %v921, %v1078
  %v1080 = vtanh.pop %v1079
  %v1081 = vsub.f32 1.0, %v1076
  %v1082 = vmul.f32 %v1081, %v1080
  %v1083 = vmul.f32 %v1076, %v915
  %v1084 = vadd.f32 %v1082, %v1083
  %s1085 = scalar_lea.vmem %s3, 40
  %1086 = vst [vmem:[%s1085] sm:$0xff] %v1084
  %s1087 = scalar_lea.vmem %s0, 144
  %v1088 = vld [vmem:[%s1087] sm:$0xff]
  %v1089 = vld [vmem:[%s1087 + $0x8] sm:$0xff]
  %v1090 = vld [vmem:[%s1087 + $0x10] sm:$0xff]
  %1091 = vmatprep.subr.mxu0 %v20
  %1092 = vmatpush1.msra.mxu0 %v19
  %1093 = vmatprep.subr.mxu0 %v23
  %1094 = vmatpush1.msra.mxu0 %v22
  %1095 = vmatprep.subr.mxu0 %v26
  %1096 = vmatpush1.msra.mxu0 %v25
  %1097 = vmatprep.subr.mxu0 %v29
  %1098 = vmatpush1.msra.mxu0 %v28
  %1099 = vmatprep.subr.mxu0 %v32
  %1100 = vmatpush1.msra.mxu0 %v31
  %1101 = vmatprep.subr.mxu0 %v35
  %1102 = vmatpush1.msra.mxu0 %v34
  %1103 = vmatprep.subr.mxu0 %v38
  %1104 = vmatpush1.msra.mxu0 %v37
  %1105 = vmatprep.subr.mxu0 %v41
  %1106 = vmatpush1.msra.mxu0 %v40
  %1107 = vmatprep.subr.mxu0 %v44
  %1108 = vmatpush1.msra.mxu0 %v43
  %1109 = vmatprep.subr.mxu0 %v47
  %1110 = vmatpush1.msra.mxu0 %v46
  %1111 = vmatprep.subr.mxu0 %v50
  %1112 = vmatpush1.msra.mxu0 %v49
  %1113 = vmatprep.subr.mxu0 %v53
  %1114 = vmatpush1.msra.mxu0 %v52
  %1115 = vmatprep.subr.mxu0 %v56
  %1116 = vmatpush1.msra.mxu0 %v55
  %1117 = vmatprep.subr.mxu0 %v59
  %1118 = vmatpush1.msra.mxu0 %v58
  %1119 = vmatprep.subr.mxu0 %v62
  %1120 = vmatpush1.msra.mxu0 %v61
  %1121 = vmatprep.subr.mxu0 %v65
  %1122 = vmatpush1.msra.mxu0 %v64
  %1123 = vmatprep.subr.mxu0 0.0
  %1124 = vmatpush1.msra.mxu0 0.0
  %1125 = vmatprep.subr.mxu0 0.0
  %1126 = vmatpush1.msra.mxu0 0.0
  %1127 = vmatprep.subr.mxu0 0.0
  %1128 = vmatpush1.msra.mxu0 0.0
  %1129 = vmatprep.subr.mxu0 0.0
  %1130 = vmatpush1.msra.mxu0 0.0
  %1131 = vmatprep.subr.mxu0 0.0
  %1132 = vmatpush1.msra.mxu0 0.0
  %1133 = vmatprep.subr.mxu0 0.0
  %1134 = vmatpush1.msra.mxu0 0.0
  %1135 = vmatprep.subr.mxu0 0.0
  %1136 = vmatpush1.msra.mxu0 0.0
  %1137 = vmatprep.subr.mxu0 0.0
  %1138 = vmatpush1.msra.mxu0 0.0
  %1139 = vmatprep.subr.mxu0 0.0
  %1140 = vmatpush1.msra.mxu0 0.0
  %1141 = vmatprep.subr.mxu0 0.0
  %1142 = vmatpush1.msra.mxu0 0.0
  %1143 = vmatprep.subr.mxu0 0.0
  %1144 = vmatpush1.msra.mxu0 0.0
  %1145 = vmatprep.subr.mxu0 0.0
  %1146 = vmatpush1.msra.mxu0 0.0
  %1147 = vmatprep.subr.mxu0 0.0
  %1148 = vmatpush1.msra.mxu0 0.0
  %1149 = vmatprep.subr.mxu0 0.0
  %1150 = vmatpush1.msra.mxu0 0.0
  %1151 = vmatprep.subr.mxu0 0.0
  %1152 = vmatpush1.msra.mxu0 0.0
  %1153 = vmatprep.subr.mxu0 0.0
  %1154 = vmatpush1.msra.mxu0 0.0
  %1155 = vmatprep.mubr.f32.mxu0 0.0
  %1156 = vmatmul.mubr.f32.gmra.mrb[0].mxu0 %v1084
  %v1157 = vpop.f32.mrb[0].mxu0
  %v1158 = vadd.f32 0.0, %v1157
  %v1159 = vpop.f32.mrb[0].mxu0
  %v1160 = vadd.f32 0.0, %v1159
  %1161 = vdwg.mxu0
  %1162 = vmatprep.subr.mxu0 0.0
  %1163 = vmatpush1.msra.mxu0 %v21
  %1164 = vmatprep.subr.mxu0 0.0
  %1165 = vmatpush1.msra.mxu0 %v24
  %1166 = vmatprep.subr.mxu0 0.0
  %1167 = vmatpush1.msra.mxu0 %v27
  %1168 = vmatprep.subr.mxu0 0.0
  %1169 = vmatpush1.msra.mxu0 %v30
  %1170 = vmatprep.subr.mxu0 0.0
  %1171 = vmatpush1.msra.mxu0 %v33
  %1172 = vmatprep.subr.mxu0 0.0
  %1173 = vmatpush1.msra.mxu0 %v36
  %1174 = vmatprep.subr.mxu0 0.0
  %1175 = vmatpush1.msra.mxu0 %v39
  %1176 = vmatprep.subr.mxu0 0.0
  %1177 = vmatpush1.msra.mxu0 %v42
  %1178 = vmatprep.subr.mxu0 0.0
  %1179 = vmatpush1.msra.mxu0 %v45
  %1180 = vmatprep.subr.mxu0 0.0
  %1181 = vmatpush1.msra.mxu0 %v48
  %1182 = vmatprep.subr.mxu0 0.0
  %1183 = vmatpush1.msra.mxu0 %v51
  %1184 = vmatprep.subr.mxu0 0.0
  %1185 = vmatpush1.msra.mxu0 %v54
  %1186 = vmatprep.subr.mxu0 0.0
  %1187 = vmatpush1.msra.mxu0 %v57
  %1188 = vmatprep.subr.mxu0 0.0
  %1189 = vmatpush1.msra.mxu0 %v60
  %1190 = vmatprep.subr.mxu0 0.0
  %1191 = vmatpush1.msra.mxu0 %v63
  %1192 = vmatprep.subr.mxu0 0.0
  %1193 = vmatpush1.msra.mxu0 %v66
  %1194 = vmatprep.subr.mxu0 0.0
  %1195 = vmatpush1.msra.mxu0 0.0
  %1196 = vmatprep.subr.mxu0 0.0
  %1197 = vmatpush1.msra.mxu0 0.0
  %1198 = vmatprep.subr.mxu0 0.0
  %1199 = vmatpush1.msra.mxu0 0.0
  %1200 = vmatprep.subr.mxu0 0.0
  %1201 = vmatpush1.msra.mxu0 0.0
  %1202 = vmatprep.subr.mxu0 0.0
  %1203 = vmatpush1.msra.mxu0 0.0
  %1204 = vmatprep.subr.mxu0 0.0
  %1205 = vmatpush1.msra.mxu0 0.0
  %1206 = vmatprep.subr.mxu0 0.0
  %1207 = vmatpush1.msra.mxu0 0.0
  %1208 = vmatprep.subr.mxu0 0.0
  %1209 = vmatpush1.msra.mxu0 0.0
  %1210 = vmatprep.subr.mxu0 0.0
  %1211 = vmatpush1.msra.mxu0 0.0
  %1212 = vmatprep.subr.mxu0 0.0
  %1213 = vmatpush1.msra.mxu0 0.0
  %1214 = vmatprep.subr.mxu0 0.0
  %1215 = vmatpush1.msra.mxu0 0.0
  %1216 = vmatprep.subr.mxu0 0.0
  %1217 = vmatpush1.msra.mxu0 0.0
  %1218 = vmatprep.subr.mxu0 0.0
  %1219 = vmatpush1.msra.mxu0 0.0
  %1220 = vmatprep.subr.mxu0 0.0
  %1221 = vmatpush1.msra.mxu0 0.0
  %1222 = vmatprep.subr.mxu0 0.0
  %1223 = vmatpush1.msra.mxu0 0.0
  %1224 = vmatprep.subr.mxu0 0.0
  %1225 = vmatpush1.msra.mxu0 0.0
  %1226 = vmatprep.mubr.f32.mxu0 0.0
  %1227 = vmatmul.mubr.f32.gmra.mrb[0].mxu0 %v1084
  %v1228 = vpop.f32.mrb[0].mxu0
  %v1229 = vadd.f32 0.0, %v1228
  %v1230 = vpop.f32.mrb[0].mxu0
  %1231 = vdwg.mxu0
  %v1232 = vadd.f32 %v1088, %v1158
  %v1233 = vxor.u32 %v1232, 2147483648
  %v1234 = vmul.f32 %v1233, 1.442695
  %v1235 = vpow.pop %v1234
  %v1236 = vadd.f32 %v1235, 1.0
  %v1237 = vrcp.pop %v1236
  %v1238 = vmul.f32 1.0, %v1237
  %v1239 = vadd.f32 %v1089, %v1160
  %v1240 = vxor.u32 %v1239, 2147483648
  %v1241 = vmul.f32 %v1240, 1.442695
  %v1242 = vpow.pop %v1241
  %v1243 = vadd.f32 %v1242, 1.0
  %v1244 = vrcp.pop %v1243
  %v1245 = vmul.f32 1.0, %v1244
  %v1246 = vadd.f32 %v1229, %v72
  %v1247 = vmul.f32 %v1238, %v1246
  %v1248 = vadd.f32 %v1090, %v1247
  %v1249 = vtanh.pop %v1248
  %v1250 = vsub.f32 1.0, %v1245
  %v1251 = vmul.f32 %v1250, %v1249
  %v1252 = vmul.f32 %v1245, %v1084
  %v1253 = vadd.f32 %v1251, %v1252
  %s1254 = scalar_lea.vmem %s3, 48
  %1255 = vst [vmem:[%s1254] sm:$0xff] %v1253
  %s1256 = scalar_lea.vmem %s0, 168
  %v1257 = vld [vmem:[%s1256] sm:$0xff]
  %v1258 = vld [vmem:[%s1256 + $0x8] sm:$0xff]
  %v1259 = vld [vmem:[%s1256 + $0x10] sm:$0xff]
  %1260 = vmatprep.subr.mxu0 %v20
  %1261 = vmatpush1.msra.mxu0 %v19
  %1262 = vmatprep.subr.mxu0 %v23
  %1263 = vmatpush1.msra.mxu0 %v22
  %1264 = vmatprep.subr.mxu0 %v26
  %1265 = vmatpush1.msra.mxu0 %v25
  %1266 = vmatprep.subr.mxu0 %v29
  %1267 = vmatpush1.msra.mxu0 %v28
  %1268 = vmatprep.subr.mxu0 %v32
  %1269 = vmatpush1.msra.mxu0 %v31
  %1270 = vmatprep.subr.mxu0 %v35
  %1271 = vmatpush1.msra.mxu0 %v34
  %1272 = vmatprep.subr.mxu0 %v38
  %1273 = vmatpush1.msra.mxu0 %v37
  %1274 = vmatprep.subr.mxu0 %v41
  %1275 = vmatpush1.msra.mxu0 %v40
  %1276 = vmatprep.subr.mxu0 %v44
  %1277 = vmatpush1.msra.mxu0 %v43
  %1278 = vmatprep.subr.mxu0 %v47
  %1279 = vmatpush1.msra.mxu0 %v46
  %1280 = vmatprep.subr.mxu0 %v50
  %1281 = vmatpush1.msra.mxu0 %v49
  %1282 = vmatprep.subr.mxu0 %v53
  %1283 = vmatpush1.msra.mxu0 %v52
  %1284 = vmatprep.subr.mxu0 %v56
  %1285 = vmatpush1.msra.mxu0 %v55
  %1286 = vmatprep.subr.mxu0 %v59
  %1287 = vmatpush1.msra.mxu0 %v58
  %1288 = vmatprep.subr.mxu0 %v62
  %1289 = vmatpush1.msra.mxu0 %v61
  %1290 = vmatprep.subr.mxu0 %v65
  %1291 = vmatpush1.msra.mxu0 %v64
  %1292 = vmatprep.subr.mxu0 0.0
  %1293 = vmatpush1.msra.mxu0 0.0
  %1294 = vmatprep.subr.mxu0 0.0
  %1295 = vmatpush1.msra.mxu0 0.0
  %1296 = vmatprep.subr.mxu0 0.0
  %1297 = vmatpush1.msra.mxu0 0.0
  %1298 = vmatprep.subr.mxu0 0.0
  %1299 = vmatpush1.msra.mxu0 0.0
  %1300 = vmatprep.subr.mxu0 0.0
  %1301 = vmatpush1.msra.mxu0 0.0
  %1302 = vmatprep.subr.mxu0 0.0
  %1303 = vmatpush1.msra.mxu0 0.0
  %1304 = vmatprep.subr.mxu0 0.0
  %1305 = vmatpush1.msra.mxu0 0.0
  %1306 = vmatprep.subr.mxu0 0.0
  %1307 = vmatpush1.msra.mxu0 0.0
  %1308 = vmatprep.subr.mxu0 0.0
  %1309 = vmatpush1.msra.mxu0 0.0
  %1310 = vmatprep.subr.mxu0 0.0
  %1311 = vmatpush1.msra.mxu0 0.0
  %1312 = vmatprep.subr.mxu0 0.0
  %1313 = vmatpush1.msra.mxu0 0.0
  %1314 = vmatprep.subr.mxu0 0.0
  %1315 = vmatpush1.msra.mxu0 0.0
  %1316 = vmatprep.subr.mxu0 0.0
  %1317 = vmatpush1.msra.mxu0 0.0
  %1318 = vmatprep.subr.mxu0 0.0
  %1319 = vmatpush1.msra.mxu0 0.0
  %1320 = vmatprep.subr.mxu0 0.0
  %1321 = vmatpush1.msra.mxu0 0.0
  %1322 = vmatprep.subr.mxu0 0.0
  %1323 = vmatpush1.msra.mxu0 0.0
  %1324 = vmatprep.mubr.f32.mxu0 0.0
  %1325 = vmatmul.mubr.f32.gmra.mrb[0].mxu0 %v1253
  %v1326 = vpop.f32.mrb[0].mxu0
  %v1327 = vadd.f32 0.0, %v1326
  %v1328 = vpop.f32.mrb[0].mxu0
  %v1329 = vadd.f32 0.0, %v1328
  %1330 = vdwg.mxu0
  %1331 = vmatprep.subr.mxu0 0.0
  %1332 = vmatpush1.msra.mxu0 %v21
  %1333 = vmatprep.subr.mxu0 0.0
  %1334 = vmatpush1.msra.mxu0 %v24
  %1335 = vmatprep.subr.mxu0 0.0
  %1336 = vmatpush1.msra.mxu0 %v27
  %1337 = vmatprep.subr.mxu0 0.0
  %1338 = vmatpush1.msra.mxu0 %v30
  %1339 = vmatprep.subr.mxu0 0.0
  %1340 = vmatpush1.msra.mxu0 %v33
  %1341 = vmatprep.subr.mxu0 0.0
  %1342 = vmatpush1.msra.mxu0 %v36
  %1343 = vmatprep.subr.mxu0 0.0
  %1344 = vmatpush1.msra.mxu0 %v39
  %1345 = vmatprep.subr.mxu0 0.0
  %1346 = vmatpush1.msra.mxu0 %v42
  %1347 = vmatprep.subr.mxu0 0.0
  %1348 = vmatpush1.msra.mxu0 %v45
  %1349 = vmatprep.subr.mxu0 0.0
  %1350 = vmatpush1.msra.mxu0 %v48
  %1351 = vmatprep.subr.mxu0 0.0
  %1352 = vmatpush1.msra.mxu0 %v51
  %1353 = vmatprep.subr.mxu0 0.0
  %1354 = vmatpush1.msra.mxu0 %v54
  %1355 = vmatprep.subr.mxu0 0.0
  %1356 = vmatpush1.msra.mxu0 %v57
  %1357 = vmatprep.subr.mxu0 0.0
  %1358 = vmatpush1.msra.mxu0 %v60
  %1359 = vmatprep.subr.mxu0 0.0
  %1360 = vmatpush1.msra.mxu0 %v63
  %1361 = vmatprep.subr.mxu0 0.0
  %1362 = vmatpush1.msra.mxu0 %v66
  %1363 = vmatprep.subr.mxu0 0.0
  %1364 = vmatpush1.msra.mxu0 0.0
  %1365 = vmatprep.subr.mxu0 0.0
  %1366 = vmatpush1.msra.mxu0 0.0
  %1367 = vmatprep.subr.mxu0 0.0
  %1368 = vmatpush1.msra.mxu0 0.0
  %1369 = vmatprep.subr.mxu0 0.0
  %1370 = vmatpush1.msra.mxu0 0.0
  %1371 = vmatprep.subr.mxu0 0.0
  %1372 = vmatpush1.msra.mxu0 0.0
  %1373 = vmatprep.subr.mxu0 0.0
  %1374 = vmatpush1.msra.mxu0 0.0
  %1375 = vmatprep.subr.mxu0 0.0
  %1376 = vmatpush1.msra.mxu0 0.0
  %1377 = vmatprep.subr.mxu0 0.0
  %1378 = vmatpush1.msra.mxu0 0.0
  %1379 = vmatprep.subr.mxu0 0.0
  %1380 = vmatpush1.msra.mxu0 0.0
  %1381 = vmatprep.subr.mxu0 0.0
  %1382 = vmatpush1.msra.mxu0 0.0
  %1383 = vmatprep.subr.mxu0 0.0
  %1384 = vmatpush1.msra.mxu0 0.0
  %1385 = vmatprep.subr.mxu0 0.0
  %1386 = vmatpush1.msra.mxu0 0.0
  %1387 = vmatprep.subr.mxu0 0.0
  %1388 = vmatpush1.msra.mxu0 0.0
  %1389 = vmatprep.subr.mxu0 0.0
  %1390 = vmatpush1.msra.mxu0 0.0
  %1391 = vmatprep.subr.mxu0 0.0
  %1392 = vmatpush1.msra.mxu0 0.0
  %1393 = vmatprep.subr.mxu0 0.0
  %1394 = vmatpush1.msra.mxu0 0.0
  %1395 = vmatprep.mubr.f32.mxu0 0.0
  %1396 = vmatmul.mubr.f32.gmra.mrb[0].mxu0 %v1253
  %v1397 = vpop.f32.mrb[0].mxu0
  %v1398 = vadd.f32 0.0, %v1397
  %v1399 = vpop.f32.mrb[0].mxu0
  %1400 = vdwg.mxu0
  %v1401 = vadd.f32 %v1257, %v1327
  %v1402 = vxor.u32 %v1401, 2147483648
  %v1403 = vmul.f32 %v1402, 1.442695
  %v1404 = vpow.pop %v1403
  %v1405 = vadd.f32 %v1404, 1.0
  %v1406 = vrcp.pop %v1405
  %v1407 = vmul.f32 1.0, %v1406
  %v1408 = vadd.f32 %v1258, %v1329
  %v1409 = vxor.u32 %v1408, 2147483648
  %v1410 = vmul.f32 %v1409, 1.442695
  %v1411 = vpow.pop %v1410
  %v1412 = vadd.f32 %v1411, 1.0
  %v1413 = vrcp.pop %v1412
  %v1414 = vmul.f32 1.0, %v1413
  %v1415 = vadd.f32 %v1398, %v72
  %v1416 = vmul.f32 %v1407, %v1415
  %v1417 = vadd.f32 %v1259, %v1416
  %v1418 = vtanh.pop %v1417
  %v1419 = vsub.f32 1.0, %v1414
  %v1420 = vmul.f32 %v1419, %v1418
  %v1421 = vmul.f32 %v1414, %v1253
  %v1422 = vadd.f32 %v1420, %v1421
  %s1423 = scalar_lea.vmem %s3, 56
  %1424 = vst [vmem:[%s1423] sm:$0xff] %v1422
  %1425 = vst [vmem:[#allocation2] sm:$0xff] %v1422
  // Predicated region
  $region18: #{gru_forward.1} parent=0 // pred_check
    _
  $region19: #{gru_forward.1} parent=0 // pred_check_branch
    %1427 = sbr.rel (0) target = $region21
  $region20: #{gru_forward.1} parent=0 // pred_region
    _
  $region21: #{gru_forward.1} parent=0 // pred_fallthru
    _
  // Predicated region
  $region22: #{gru_forward.1} parent=0 // pred_check
    _
  $region23: #{gru_forward.1} parent=0 // pred_check_branch
    %1429 = sbr.rel (0) target = $region25
  $region24: #{gru_forward.1} parent=0 // pred_region
    _
  $region25: #{gru_forward.1} parent=0 // pred_fallthru
    _

</llo_original>
